<compile_context>
chip_gen: v6e
topology: v6e:2x2x1
jax: 0.10.0
libtpu: 0.0.40
codegen_flags: <defaults>
</compile_context>

<pallas_src>
import jax
import jax.numpy as jnp
from jax.experimental import pallas as pl
from jax.experimental.pallas import tpu as pltpu

LANE = 128     # vreg lane width
SUBLANE = 8    # vreg sublane count


def _round_up(x, m):
    return ((x + m - 1) // m) * m


def joint_forward_kernel(x_ref, wf_ref, bf_ref, wc_ref, bc_ref, o_ref):
    """Fused feature-projection + classifier for one batch tile.

    x_ref  : (tm, Kp) bf16   flattened, padded input tile
    wf_ref : (Kp, F)  bf16   feature-projection weight (zero-padded rows)
    bf_ref : (1,  F)  f32    feature bias
    wc_ref : (F,  Np) bf16   classifier weight (zero-padded lanes)
    bc_ref : (1,  Np) f32    classifier bias   (zero-padded lanes)
    o_ref  : (tm, Np) f32    padded logits tile
    """
    # Feature projection: bf16 operands, f32 MXU accumulation, f32 bias add.
    feats = jnp.dot(x_ref[...], wf_ref[...], preferred_element_type=jnp.float32)
    feats = feats + bf_ref[...]
    # Classifier on the VMEM-resident activation (never written back to HBM).
    logits = jnp.dot(feats.astype(jnp.bfloat16), wc_ref[...],
                     preferred_element_type=jnp.float32)
    o_ref[...] = (logits + bc_ref[...]).astype(o_ref.dtype)


def _fused_joint_forward(x_flat, w_feat_p, b_feat, w_cls_p, b_cls_p):
    """logits_padded = ((x @ w_feat + b_feat) @ w_cls + b_cls), all in one kernel.

    x_flat:   (M, K)   f32 (cast/padded here)
    w_feat_p: (Kp, F)  bf16, K zero-padded to Kp (multiple of 128)
    b_feat:   (1, F)   f32
    w_cls_p:  (F, Np)  bf16, numclass zero-padded to Np (multiple of 128)
    b_cls_p:  (1, Np)  f32
    returns   (Mp, Np) f32, M zero-padded to Mp (multiple of the batch tile).
    """
    M, K = x_flat.shape
    Kp, F = w_feat_p.shape
    F2, Np = w_cls_p.shape
    assert F == F2 and K <= Kp

    # Batch tile: sublane-dense for tiny B, 128-row tiles for real batches so
    # the grid axis can be split across TensorCores (v7x) / pipelined.
    tm = min(128, _round_up(M, SUBLANE))
    Mp = _round_up(M, tm)

    # Pad + cast the activation at the pallas_call boundary (zero padding is exact).
    xp = jnp.zeros((Mp, Kp), jnp.bfloat16)
    xp = xp.at[:M, :K].set(x_flat.astype(jnp.bfloat16))

    grid = (Mp // tm,)
    flops = 2 * Mp * Kp * F + 2 * Mp * F * Np
    bytes_accessed = (xp.size * 2 + w_feat_p.size * 2 + w_cls_p.size * 2
                      + b_feat.size * 4 + b_cls_p.size * 4 + Mp * Np * 4)

    # TODO(synk): when the placeholder feature projection is replaced by a real
    # ResNet-sized flat dim, add a K-reduction grid axis (accumulator scratch +
    # pl.when init/finalize) instead of holding the full (Kp, F) weight in VMEM;
    # size tiles against 32 MiB scoped VMEM for v7x.
    return pl.pallas_call(
        joint_forward_kernel,
        out_shape=jax.ShapeDtypeStruct((Mp, Np), jnp.float32),
        grid_spec=pltpu.PrefetchScalarGridSpec(
            num_scalar_prefetch=0,
            grid=grid,
            in_specs=[
                pl.BlockSpec((tm, Kp), lambda i: (i, 0)),   # x tile per batch block
                pl.BlockSpec((Kp, F), lambda i: (0, 0)),    # feature weight (resident)
                pl.BlockSpec((1, F), lambda i: (0, 0)),     # feature bias
                pl.BlockSpec((F, Np), lambda i: (0, 0)),    # classifier weight
                pl.BlockSpec((1, Np), lambda i: (0, 0)),    # classifier bias
            ],
            out_specs=pl.BlockSpec((tm, Np), lambda i: (i, 0)),
        ),
        compiler_params=pltpu.CompilerParams(
            dimension_semantics=("parallel",),            # batch tiles are independent
            vmem_limit_bytes=64 * 1024 * 1024,
        ),
        cost_estimate=pl.CostEstimate(
            flops=flops, transcendentals=0, bytes_accessed=bytes_accessed),
    )(xp, w_feat_p, b_feat, w_cls_p, b_cls_p)


_fused_joint_forward_jit = jax.jit(_fused_joint_forward)


class JointNetworkPallas:
    """Pallas port of joint_network: forward() = classifier(feature(input))."""

    def __init__(self, numclass, key, in_ch=3, img=16, feat_dim=512):
        self.numclass = numclass
        self.feat_dim = feat_dim
        k0, k1, k2, k3, k4, k5 = jax.random.split(key, 6)
        flat = in_ch * img * img
        self.flat = flat
        self.Kp = _round_up(flat, LANE)        # lane-dense padded K
        self.Np = _round_up(numclass, LANE)    # lane-dense padded numclass

        # TODO(synk): the real feature extractor is an external torchvision-style
        # ResNet (not defined in myNetwork.py); a deterministic linear projection
        # to the 512-d feature space stands in for it, fused into the same kernel.
        self.w_feat = (jax.random.normal(k0, (flat, feat_dim), jnp.float32)
                       / jnp.sqrt(jnp.float32(flat)))
        self.b_feat = jax.random.normal(k1, (1, feat_dim), jnp.float32) * 0.01

        # classifier: nn.Linear(512, numclass) -- the layer forward() actually uses.
        self.w_cls = (jax.random.normal(k2, (feat_dim, numclass), jnp.float32)
                      / jnp.sqrt(jnp.float32(feat_dim)))
        self.b_cls = jax.random.normal(k3, (1, numclass), jnp.float32) * 0.01

        # fc: nn.Linear(512, numclass*4) -- declared in __init__ but unused by forward().
        self.w_fc = (jax.random.normal(k4, (feat_dim, numclass * 4), jnp.float32)
                     / jnp.sqrt(jnp.float32(feat_dim)))
        self.b_fc = jax.random.normal(k5, (1, numclass * 4), jnp.float32) * 0.01

        # --- padded bf16 kernel operands (built once at init, not per call) ---
        self.w_feat_p = (jnp.zeros((self.Kp, feat_dim), jnp.bfloat16)
                         .at[:flat, :].set(self.w_feat.astype(jnp.bfloat16)))
        self.w_cls_p = (jnp.zeros((feat_dim, self.Np), jnp.bfloat16)
                        .at[:, :numclass].set(self.w_cls.astype(jnp.bfloat16)))
        self.b_cls_p = (jnp.zeros((1, self.Np), jnp.float32)
                        .at[:, :numclass].set(self.b_cls))

    def forward(self, x_nchw):
        B = x_nchw.shape[0]
        x_flat = x_nchw.reshape(B, -1)                       # glue: flatten NCHW
        logits_pad = _fused_joint_forward_jit(
            x_flat, self.w_feat_p, self.b_feat, self.w_cls_p, self.b_cls_p)
        return logits_pad[:B, :self.numclass]                # strip M/N padding


if __name__ == "__main__":
    key = jax.random.PRNGKey(0)
    kx, kp = jax.random.split(key)

    numclass = 8
    x = jax.random.normal(kx, (2, 3, 16, 16), jnp.float32)   # NCHW, like PyTorch

    net = JointNetworkPallas(numclass, kp)
    out = net.forward(x)
    out = jax.block_until_ready(out)
    assert out.shape == (2, numclass), out.shape

    # pure-JAX reference with identical bf16-operand / f32-accumulate numerics
    xb = x.reshape(2, -1).astype(jnp.bfloat16).astype(jnp.float32)
    wf = net.w_feat.astype(jnp.bfloat16).astype(jnp.float32)
    wc = net.w_cls.astype(jnp.bfloat16).astype(jnp.float32)
    feats_ref = xb @ wf + net.b_feat
    ref = feats_ref.astype(jnp.bfloat16).astype(jnp.float32) @ wc + net.b_cls
    assert jnp.allclose(out, ref, atol=5e-3, rtol=5e-3), float(jnp.max(jnp.abs(out - ref)))

    print("KERNEL_OK")
</pallas_src>

<mosaic_0001>
module attributes {stable_mosaic.version = 11 : i64} {
  func.func @joint_forward_kernel(%arg0: i32, %arg1: memref<8x768xbf16, #tpu.memory_space<vmem>>, %arg2: memref<768x512xbf16, #tpu.memory_space<vmem>>, %arg3: memref<1x512xf32, #tpu.memory_space<vmem>>, %arg4: memref<512x128xbf16, #tpu.memory_space<vmem>>, %arg5: memref<1x128xf32, #tpu.memory_space<vmem>>, %arg6: memref<8x128xf32, #tpu.memory_space<vmem>>) attributes {dimension_semantics = [#tpu.dimension_semantics<parallel>], iteration_bounds = array<i64: 1>, scalar_prefetch = 0 : i64, scratch_operands = 0 : i64, tpu.core_type = #tpu.core_type<tc>, window_params = [{transform_indices = @transform_0, window_bounds = array<i64: 8, 768>}, {pipeline_mode = #tpu.pipeline_mode<synchronous>, transform_indices = @transform_1, window_bounds = array<i64: 768, 512>}, {pipeline_mode = #tpu.pipeline_mode<synchronous>, transform_indices = @transform_2, window_bounds = array<i64: 1, 512>}, {pipeline_mode = #tpu.pipeline_mode<synchronous>, transform_indices = @transform_3, window_bounds = array<i64: 512, 128>}, {pipeline_mode = #tpu.pipeline_mode<synchronous>, transform_indices = @transform_4, window_bounds = array<i64: 1, 128>}, {transform_indices = @transform_5, window_bounds = array<i64: 8, 128>}]} {
    %c0 = arith.constant 0 : index
    %c0_0 = arith.constant 0 : index
    %0 = vector.load %arg1[%c0, %c0_0] : memref<8x768xbf16, #tpu.memory_space<vmem>>, vector<8x768xbf16>
    %c0_1 = arith.constant 0 : index
    %c0_2 = arith.constant 0 : index
    %1 = vector.load %arg2[%c0_1, %c0_2] : memref<768x512xbf16, #tpu.memory_space<vmem>>, vector<768x512xbf16>
    %cst = arith.constant dense<0.000000e+00> : vector<8x512xf32>
    %2 = tpu.matmul %0, %1, %cst {dimension_numbers = #tpu.dot_dimension_numbers<[1], [0], [0], [1], [0, 0, 1, 1], [], []>} : vector<8x768xbf16>, vector<768x512xbf16>, vector<8x512xf32> -> vector<8x512xf32>
    %c0_3 = arith.constant 0 : index
    %c0_4 = arith.constant 0 : index
    %3 = vector.load %arg3[%c0_3, %c0_4] : memref<1x512xf32, #tpu.memory_space<vmem>>, vector<1x512xf32>
    %4 = vector.broadcast %3 : vector<1x512xf32> to vector<8x512xf32>
    %5 = arith.addf %2, %4 : vector<8x512xf32>
    %6 = arith.truncf %5 : vector<8x512xf32> to vector<8x512xbf16>
    %c0_5 = arith.constant 0 : index
    %c0_6 = arith.constant 0 : index
    %7 = vector.load %arg4[%c0_5, %c0_6] : memref<512x128xbf16, #tpu.memory_space<vmem>>, vector<512x128xbf16>
    %cst_7 = arith.constant dense<0.000000e+00> : vector<8x128xf32>
    %8 = tpu.matmul %6, %7, %cst_7 {dimension_numbers = #tpu.dot_dimension_numbers<[1], [0], [0], [1], [0, 0, 1, 1], [], []>} : vector<8x512xbf16>, vector<512x128xbf16>, vector<8x128xf32> -> vector<8x128xf32>
    %c0_8 = arith.constant 0 : index
    %c0_9 = arith.constant 0 : index
    %9 = vector.load %arg5[%c0_8, %c0_9] : memref<1x128xf32, #tpu.memory_space<vmem>>, vector<1x128xf32>
    %10 = vector.broadcast %9 : vector<1x128xf32> to vector<8x128xf32>
    %11 = arith.addf %8, %10 : vector<8x128xf32>
    %c0_10 = arith.constant 0 : index
    %c0_11 = arith.constant 0 : index
    %12 = vector.load %arg6[%c0_10, %c0_11] : memref<8x128xf32, #tpu.memory_space<vmem>>, vector<8x128xf32>
    tpu.vector_store %arg6[%c0_10, %c0_11], %11 {strides = array<i32>} : memref<8x128xf32, #tpu.memory_space<vmem>>, vector<8x128xf32>,
    return
  }
  func.func @transform_0(%arg0: i32) -> (i32, i32) {
    %c0_i32 = arith.constant 0 : i32
    %c0_i32_0 = arith.constant 0 : i32
    return %arg0, %c0_i32 : i32, i32
  }
  func.func @transform_1(%arg0: i32) -> (i32, i32) {
    %c0_i32 = arith.constant 0 : i32
    %c0_i32_0 = arith.constant 0 : i32
    %c0_i32_1 = arith.constant 0 : i32
    return %c0_i32, %c0_i32_0 : i32, i32
  }
  func.func @transform_2(%arg0: i32) -> (i32, i32) {
    %c0_i32 = arith.constant 0 : i32
    %c0_i32_0 = arith.constant 0 : i32
    %c0_i32_1 = arith.constant 0 : i32
    return %c0_i32, %c0_i32_0 : i32, i32
  }
  func.func @transform_3(%arg0: i32) -> (i32, i32) {
    %c0_i32 = arith.constant 0 : i32
    %c0_i32_0 = arith.constant 0 : i32
    %c0_i32_1 = arith.constant 0 : i32
    return %c0_i32, %c0_i32_0 : i32, i32
  }
  func.func @transform_4(%arg0: i32) -> (i32, i32) {
    %c0_i32 = arith.constant 0 : i32
    %c0_i32_0 = arith.constant 0 : i32
    %c0_i32_1 = arith.constant 0 : i32
    return %c0_i32, %c0_i32_0 : i32, i32
  }
  func.func @transform_5(%arg0: i32) -> (i32, i32) {
    %c0_i32 = arith.constant 0 : i32
    %c0_i32_0 = arith.constant 0 : i32
    return %arg0, %c0_i32 : i32, i32
  }
}

</mosaic_0001>

<llo_original>
// kernel: _fused_joint_forward.1
$region0: #{_fused_joint_forward.1}
  #allocation0 [shape = 'u32[]', space=smem, size = 0x4, offset = 0x4, fixed_abs, tag = 'smem constant byte address 0x4 - core index']
  #allocation1 [shape = 'u32[144,128]{1,0:T(1,128)}', space=vmem, size = 0x12000, scoped, tag = 'internal scratch']
  %s0 = inlined_call_operand.vmem [shape: bf16[8,768], index: 0, kind: input, shape index: {}]
  %s1 = inlined_call_operand.hbm [shape: bf16[768,512], index: 1, kind: input, shape index: {}]
  %s2 = inlined_call_operand.vmem [shape: f32[1,512], index: 2, kind: input, shape index: {}]
  %s3 = inlined_call_operand.hbm [shape: bf16[512,128], index: 3, kind: input, shape index: {}]
  %s4 = inlined_call_operand.vmem [shape: f32[1,128], index: 4, kind: input, shape index: {}]
  %s5 = inlined_call_operand.hbm [shape: f32[8,128], index: 5, kind: output, shape index: {}]
  %s6 = sld [smem:[#allocation0]]
  $region38: #{_fused_joint_forward.1} parent=0
    _
  %s8 = ssub.s32 1, %s6
  %s9 = scalar_select 0, %s8, %s6
  $region1: #{_fused_joint_forward.1} parent=0
    #allocation2 [shape = 'u8[786432]{0}', space=vmem, size = 0xc0000, scoped, tag = 'input window, operand 1, single buffered']
    #allocation3 [shape = 's32[1]{0}', space=sflag, size = 0x4, scoped, tag = 'scoped memory for _fused_joint_forward.1']
    #allocation4 [shape = 's32[1]{0}', space=sflag, size = 0x4, scoped, tag = 'scoped memory for _fused_joint_forward.1']
    #allocation5 [shape = 'u8[131072]{0}', space=vmem, size = 0x20000, scoped, tag = 'input window, operand 3, single buffered']
    #allocation6 [shape = 's32[1]{0}', space=sflag, size = 0x4, scoped, tag = 'scoped memory for _fused_joint_forward.1']
    #allocation7 [shape = 'u8[4096]{0}', space=vmem, size = 0x1000, scoped, tag = 'output window, operand 0, single buffered']
    %10 = vsyncpa [#allocation3], 0
    %11 = vsyncpa [#allocation6], 0
    %12 = vsyncpa [#allocation4], 0
    // Predicated region
    $region2: #{_fused_joint_forward.1} parent=1 // pred_check
      _
    $region3: #{_fused_joint_forward.1} parent=1 // pred_check_branch
      %14 = sbr.rel (0) target = $region5
    $region4: #{_fused_joint_forward.1} parent=1 // pred_region
      _
    $region5: #{_fused_joint_forward.1} parent=1 // pred_fallthru
      _
    // Predicated region
    $region6: #{_fused_joint_forward.1} parent=1 // pred_check
      _
    $region7: #{_fused_joint_forward.1} parent=1 // pred_check_branch
      %16 = sbr.rel (0) target = $region9
    $region8: #{_fused_joint_forward.1} parent=1 // pred_region
      %s18 = ssub.s32 24576, 24576
      %19 = vsyncadd [#allocation3], %s18
      %s20 = sshll.u32 [#allocation2], 4
      %s21 = int_to_ptr.vmem [resolvable:$true] %s20
      %26 = dma.hbm_to_vmem [thread:$0]  %s1, 24576, %s21, [#allocation3], 256, 256, 16
    $region9: #{_fused_joint_forward.1} parent=1 // pred_fallthru
      _
    // Predicated region
    $region10: #{_fused_joint_forward.1} parent=1 // pred_check
      _
    $region11: #{_fused_joint_forward.1} parent=1 // pred_check_branch
      %28 = sbr.rel (0) target = $region13
    $region12: #{_fused_joint_forward.1} parent=1 // pred_region
      _
    $region13: #{_fused_joint_forward.1} parent=1 // pred_fallthru
      _
    // Predicated region
    $region14: #{_fused_joint_forward.1} parent=1 // pred_check
      _
    $region15: #{_fused_joint_forward.1} parent=1 // pred_check_branch
      %30 = sbr.rel (0) target = $region17
    $region16: #{_fused_joint_forward.1} parent=1 // pred_region
      %s32 = ssub.s32 4096, 4096
      %33 = vsyncadd [#allocation6], %s32
      %s34 = sshll.u32 [#allocation5], 4
      %s35 = int_to_ptr.vmem [resolvable:$true] %s34
      %40 = dma.hbm_to_vmem [thread:$0]  %s3, 4096, %s35, [#allocation6], 64, 64, 4
    $region17: #{_fused_joint_forward.1} parent=1 // pred_fallthru
      _
    // Predicated region
    $region18: #{_fused_joint_forward.1} parent=1 // pred_check
      _
    $region19: #{_fused_joint_forward.1} parent=1 // pred_check_branch
      %42 = sbr.rel (0) target = $region21
    $region20: #{_fused_joint_forward.1} parent=1 // pred_region
      _
    $region21: #{_fused_joint_forward.1} parent=1 // pred_fallthru
      _
    // Predicated region
    $region22: #{_fused_joint_forward.1} parent=1 // pred_check
      _
    $region23: #{_fused_joint_forward.1} parent=1 // pred_check_branch
      %44 = sbr.rel (0) target = $region25
    $region24: #{_fused_joint_forward.1} parent=1 // pred_region
      %45 = dma.done [#allocation3], 24576
    $region25: #{_fused_joint_forward.1} parent=1 // pred_fallthru
      _
    // Predicated region
    $region26: #{_fused_joint_forward.1} parent=1 // pred_check
      _
    $region27: #{_fused_joint_forward.1} parent=1 // pred_check_branch
      %47 = sbr.rel (0) target = $region29
    $region28: #{_fused_joint_forward.1} parent=1 // pred_region
      %48 = dma.done [#allocation6], 4096
    $region29: #{_fused_joint_forward.1} parent=1 // pred_fallthru
      _
    %v50 = vld [vmem:[%s0] sm:$0xff]
    %v51 = vld [vmem:[%s0 + $0x8] sm:$0xff]
    %v52 = vld [vmem:[%s0 + $0x10] sm:$0xff]
    %v53 = vld [vmem:[#allocation2] sm:$0xff]
    %v54 = vld [vmem:[#allocation2 + $0x8] sm:$0xff]
    %v55 = vld [vmem:[#allocation2 + $0x10] sm:$0xff]
    %v56 = vld [vmem:[#allocation2 + $0x18] sm:$0xff]
    %v57 = vld [vmem:[#allocation2 + $0x20] sm:$0xff]
    %v58 = vld [vmem:[#allocation2 + $0x28] sm:$0xff]
    %v59 = vld [vmem:[#allocation2 + $0x30] sm:$0xff]
    %v60 = vld [vmem:[#allocation2 + $0x38] sm:$0xff]
    %v61 = vld [vmem:[#allocation2 + $0x40] sm:$0xff]
    %v62 = vld [vmem:[#allocation2 + $0x48] sm:$0xff]
    %v63 = vld [vmem:[#allocation2 + $0x50] sm:$0xff]
    %v64 = vld [vmem:[#allocation2 + $0x58] sm:$0xff]
    %v65 = vld [vmem:[#allocation2 + $0x60] sm:$0xff]
    %v66 = vld [vmem:[#allocation2 + $0x68] sm:$0xff]
    %v67 = vld [vmem:[#allocation2 + $0x70] sm:$0xff]
    %v68 = vld [vmem:[#allocation2 + $0x78] sm:$0xff]
    %v69 = vld [vmem:[#allocation2 + $0x80] sm:$0xff]
    %v70 = vld [vmem:[#allocation2 + $0x88] sm:$0xff]
    %v71 = vld [vmem:[#allocation2 + $0x90] sm:$0xff]
    %v72 = vld [vmem:[#allocation2 + $0x98] sm:$0xff]
    %v73 = vld [vmem:[#allocation2 + $0xa0] sm:$0xff]
    %v74 = vld [vmem:[#allocation2 + $0xa8] sm:$0xff]
    %v75 = vld [vmem:[#allocation2 + $0xb0] sm:$0xff]
    %v76 = vld [vmem:[#allocation2 + $0xb8] sm:$0xff]
    %v77 = vld [vmem:[#allocation2 + $0xc0] sm:$0xff]
    %v78 = vld [vmem:[#allocation2 + $0xc8] sm:$0xff]
    %v79 = vld [vmem:[#allocation2 + $0xd0] sm:$0xff]
    %v80 = vld [vmem:[#allocation2 + $0xd8] sm:$0xff]
    %v81 = vld [vmem:[#allocation2 + $0xe0] sm:$0xff]
    %v82 = vld [vmem:[#allocation2 + $0xe8] sm:$0xff]
    %v83 = vld [vmem:[#allocation2 + $0xf0] sm:$0xff]
    %v84 = vld [vmem:[#allocation2 + $0xf8] sm:$0xff]
    %v85 = vld [vmem:[#allocation2 + $0x100] sm:$0xff]
    %v86 = vld [vmem:[#allocation2 + $0x108] sm:$0xff]
    %v87 = vld [vmem:[#allocation2 + $0x110] sm:$0xff]
    %v88 = vld [vmem:[#allocation2 + $0x118] sm:$0xff]
    %v89 = vld [vmem:[#allocation2 + $0x120] sm:$0xff]
    %v90 = vld [vmem:[#allocation2 + $0x128] sm:$0xff]
    %v91 = vld [vmem:[#allocation2 + $0x130] sm:$0xff]
    %v92 = vld [vmem:[#allocation2 + $0x138] sm:$0xff]
    %v93 = vld [vmem:[#allocation2 + $0x140] sm:$0xff]
    %v94 = vld [vmem:[#allocation2 + $0x148] sm:$0xff]
    %v95 = vld [vmem:[#allocation2 + $0x150] sm:$0xff]
    %v96 = vld [vmem:[#allocation2 + $0x158] sm:$0xff]
    %v97 = vld [vmem:[#allocation2 + $0x160] sm:$0xff]
    %v98 = vld [vmem:[#allocation2 + $0x168] sm:$0xff]
    %v99 = vld [vmem:[#allocation2 + $0x170] sm:$0xff]
    %v100 = vld [vmem:[#allocation2 + $0x178] sm:$0xff]
    %v101 = vld [vmem:[#allocation2 + $0x180] sm:$0xff]
    %v102 = vld [vmem:[#allocation2 + $0x188] sm:$0xff]
    %v103 = vld [vmem:[#allocation2 + $0x190] sm:$0xff]
    %v104 = vld [vmem:[#allocation2 + $0x198] sm:$0xff]
    %v105 = vld [vmem:[#allocation2 + $0x1a0] sm:$0xff]
    %v106 = vld [vmem:[#allocation2 + $0x1a8] sm:$0xff]
    %v107 = vld [vmem:[#allocation2 + $0x1b0] sm:$0xff]
    %v108 = vld [vmem:[#allocation2 + $0x1b8] sm:$0xff]
    %v109 = vld [vmem:[#allocation2 + $0x1c0] sm:$0xff]
    %v110 = vld [vmem:[#allocation2 + $0x1c8] sm:$0xff]
    %v111 = vld [vmem:[#allocation2 + $0x1d0] sm:$0xff]
    %v112 = vld [vmem:[#allocation2 + $0x1d8] sm:$0xff]
    %v113 = vld [vmem:[#allocation2 + $0x1e0] sm:$0xff]
    %v114 = vld [vmem:[#allocation2 + $0x1e8] sm:$0xff]
    %v115 = vld [vmem:[#allocation2 + $0x1f0] sm:$0xff]
    %v116 = vld [vmem:[#allocation2 + $0x1f8] sm:$0xff]
    %v117 = vld [vmem:[#allocation2 + $0x200] sm:$0xff]
    %v118 = vld [vmem:[#allocation2 + $0x208] sm:$0xff]
    %v119 = vld [vmem:[#allocation2 + $0x210] sm:$0xff]
    %v120 = vld [vmem:[#allocation2 + $0x218] sm:$0xff]
    %v121 = vld [vmem:[#allocation2 + $0x220] sm:$0xff]
    %v122 = vld [vmem:[#allocation2 + $0x228] sm:$0xff]
    %v123 = vld [vmem:[#allocation2 + $0x230] sm:$0xff]
    %v124 = vld [vmem:[#allocation2 + $0x238] sm:$0xff]
    %v125 = vld [vmem:[#allocation2 + $0x240] sm:$0xff]
    %v126 = vld [vmem:[#allocation2 + $0x248] sm:$0xff]
    %v127 = vld [vmem:[#allocation2 + $0x250] sm:$0xff]
    %v128 = vld [vmem:[#allocation2 + $0x258] sm:$0xff]
    %v129 = vld [vmem:[#allocation2 + $0x260] sm:$0xff]
    %v130 = vld [vmem:[#allocation2 + $0x268] sm:$0xff]
    %v131 = vld [vmem:[#allocation2 + $0x270] sm:$0xff]
    %v132 = vld [vmem:[#allocation2 + $0x278] sm:$0xff]
    %v133 = vld [vmem:[#allocation2 + $0x280] sm:$0xff]
    %v134 = vld [vmem:[#allocation2 + $0x288] sm:$0xff]
    %v135 = vld [vmem:[#allocation2 + $0x290] sm:$0xff]
    %v136 = vld [vmem:[#allocation2 + $0x298] sm:$0xff]
    %v137 = vld [vmem:[#allocation2 + $0x2a0] sm:$0xff]
    %v138 = vld [vmem:[#allocation2 + $0x2a8] sm:$0xff]
    %v139 = vld [vmem:[#allocation2 + $0x2b0] sm:$0xff]
    %v140 = vld [vmem:[#allocation2 + $0x2b8] sm:$0xff]
    %v141 = vld [vmem:[#allocation2 + $0x2c0] sm:$0xff]
    %v142 = vld [vmem:[#allocation2 + $0x2c8] sm:$0xff]
    %v143 = vld [vmem:[#allocation2 + $0x2d0] sm:$0xff]
    %v144 = vld [vmem:[#allocation2 + $0x2d8] sm:$0xff]
    %v145 = vld [vmem:[#allocation2 + $0x2e0] sm:$0xff]
    %v146 = vld [vmem:[#allocation2 + $0x2e8] sm:$0xff]
    %v147 = vld [vmem:[#allocation2 + $0x2f0] sm:$0xff]
    %v148 = vld [vmem:[#allocation2 + $0x2f8] sm:$0xff]
    %v149 = vld [vmem:[#allocation2 + $0x300] sm:$0xff]
    %v150 = vld [vmem:[#allocation2 + $0x308] sm:$0xff]
    %v151 = vld [vmem:[#allocation2 + $0x310] sm:$0xff]
    %v152 = vld [vmem:[#allocation2 + $0x318] sm:$0xff]
    %v153 = vld [vmem:[#allocation2 + $0x320] sm:$0xff]
    %v154 = vld [vmem:[#allocation2 + $0x328] sm:$0xff]
    %v155 = vld [vmem:[#allocation2 + $0x330] sm:$0xff]
    %v156 = vld [vmem:[#allocation2 + $0x338] sm:$0xff]
    %v157 = vld [vmem:[#allocation2 + $0x340] sm:$0xff]
    %v158 = vld [vmem:[#allocation2 + $0x348] sm:$0xff]
    %v159 = vld [vmem:[#allocation2 + $0x350] sm:$0xff]
    %v160 = vld [vmem:[#allocation2 + $0x358] sm:$0xff]
    %v161 = vld [vmem:[#allocation2 + $0x360] sm:$0xff]
    %v162 = vld [vmem:[#allocation2 + $0x368] sm:$0xff]
    %v163 = vld [vmem:[#allocation2 + $0x370] sm:$0xff]
    %v164 = vld [vmem:[#allocation2 + $0x378] sm:$0xff]
    %v165 = vld [vmem:[#allocation2 + $0x380] sm:$0xff]
    %v166 = vld [vmem:[#allocation2 + $0x388] sm:$0xff]
    %v167 = vld [vmem:[#allocation2 + $0x390] sm:$0xff]
    %v168 = vld [vmem:[#allocation2 + $0x398] sm:$0xff]
    %v169 = vld [vmem:[#allocation2 + $0x3a0] sm:$0xff]
    %v170 = vld [vmem:[#allocation2 + $0x3a8] sm:$0xff]
    %v171 = vld [vmem:[#allocation2 + $0x3b0] sm:$0xff]
    %v172 = vld [vmem:[#allocation2 + $0x3b8] sm:$0xff]
    %v173 = vld [vmem:[#allocation2 + $0x3c0] sm:$0xff]
    %v174 = vld [vmem:[#allocation2 + $0x3c8] sm:$0xff]
    %v175 = vld [vmem:[#allocation2 + $0x3d0] sm:$0xff]
    %v176 = vld [vmem:[#allocation2 + $0x3d8] sm:$0xff]
    %v177 = vld [vmem:[#allocation2 + $0x3e0] sm:$0xff]
    %v178 = vld [vmem:[#allocation2 + $0x3e8] sm:$0xff]
    %v179 = vld [vmem:[#allocation2 + $0x3f0] sm:$0xff]
    %v180 = vld [vmem:[#allocation2 + $0x3f8] sm:$0xff]
    %v181 = vld [vmem:[#allocation2 + $0x400] sm:$0xff]
    %v182 = vld [vmem:[#allocation2 + $0x408] sm:$0xff]
    %v183 = vld [vmem:[#allocation2 + $0x410] sm:$0xff]
    %v184 = vld [vmem:[#allocation2 + $0x418] sm:$0xff]
    %v185 = vld [vmem:[#allocation2 + $0x420] sm:$0xff]
    %v186 = vld [vmem:[#allocation2 + $0x428] sm:$0xff]
    %v187 = vld [vmem:[#allocation2 + $0x430] sm:$0xff]
    %v188 = vld [vmem:[#allocation2 + $0x438] sm:$0xff]
    %v189 = vld [vmem:[#allocation2 + $0x440] sm:$0xff]
    %v190 = vld [vmem:[#allocation2 + $0x448] sm:$0xff]
    %v191 = vld [vmem:[#allocation2 + $0x450] sm:$0xff]
    %v192 = vld [vmem:[#allocation2 + $0x458] sm:$0xff]
    %v193 = vld [vmem:[#allocation2 + $0x460] sm:$0xff]
    %v194 = vld [vmem:[#allocation2 + $0x468] sm:$0xff]
    %v195 = vld [vmem:[#allocation2 + $0x470] sm:$0xff]
    %v196 = vld [vmem:[#allocation2 + $0x478] sm:$0xff]
    %v197 = vld [vmem:[#allocation2 + $0x480] sm:$0xff]
    %v198 = vld [vmem:[#allocation2 + $0x488] sm:$0xff]
    %v199 = vld [vmem:[#allocation2 + $0x490] sm:$0xff]
    %v200 = vld [vmem:[#allocation2 + $0x498] sm:$0xff]
    %v201 = vld [vmem:[#allocation2 + $0x4a0] sm:$0xff]
    %v202 = vld [vmem:[#allocation2 + $0x4a8] sm:$0xff]
    %v203 = vld [vmem:[#allocation2 + $0x4b0] sm:$0xff]
    %v204 = vld [vmem:[#allocation2 + $0x4b8] sm:$0xff]
    %v205 = vld [vmem:[#allocation2 + $0x4c0] sm:$0xff]
    %v206 = vld [vmem:[#allocation2 + $0x4c8] sm:$0xff]
    %v207 = vld [vmem:[#allocation2 + $0x4d0] sm:$0xff]
    %v208 = vld [vmem:[#allocation2 + $0x4d8] sm:$0xff]
    %v209 = vld [vmem:[#allocation2 + $0x4e0] sm:$0xff]
    %v210 = vld [vmem:[#allocation2 + $0x4e8] sm:$0xff]
    %v211 = vld [vmem:[#allocation2 + $0x4f0] sm:$0xff]
    %v212 = vld [vmem:[#allocation2 + $0x4f8] sm:$0xff]
    %v213 = vld [vmem:[#allocation2 + $0x500] sm:$0xff]
    %v214 = vld [vmem:[#allocation2 + $0x508] sm:$0xff]
    %v215 = vld [vmem:[#allocation2 + $0x510] sm:$0xff]
    %v216 = vld [vmem:[#allocation2 + $0x518] sm:$0xff]
    %v217 = vld [vmem:[#allocation2 + $0x520] sm:$0xff]
    %v218 = vld [vmem:[#allocation2 + $0x528] sm:$0xff]
    %v219 = vld [vmem:[#allocation2 + $0x530] sm:$0xff]
    %v220 = vld [vmem:[#allocation2 + $0x538] sm:$0xff]
    %v221 = vld [vmem:[#allocation2 + $0x540] sm:$0xff]
    %v222 = vld [vmem:[#allocation2 + $0x548] sm:$0xff]
    %v223 = vld [vmem:[#allocation2 + $0x550] sm:$0xff]
    %v224 = vld [vmem:[#allocation2 + $0x558] sm:$0xff]
    %v225 = vld [vmem:[#allocation2 + $0x560] sm:$0xff]
    %v226 = vld [vmem:[#allocation2 + $0x568] sm:$0xff]
    %v227 = vld [vmem:[#allocation2 + $0x570] sm:$0xff]
    %v228 = vld [vmem:[#allocation2 + $0x578] sm:$0xff]
    %v229 = vld [vmem:[#allocation2 + $0x580] sm:$0xff]
    %v230 = vld [vmem:[#allocation2 + $0x588] sm:$0xff]
    %v231 = vld [vmem:[#allocation2 + $0x590] sm:$0xff]
    %v232 = vld [vmem:[#allocation2 + $0x598] sm:$0xff]
    %v233 = vld [vmem:[#allocation2 + $0x5a0] sm:$0xff]
    %v234 = vld [vmem:[#allocation2 + $0x5a8] sm:$0xff]
    %v235 = vld [vmem:[#allocation2 + $0x5b0] sm:$0xff]
    %v236 = vld [vmem:[#allocation2 + $0x5b8] sm:$0xff]
    %v237 = vld [vmem:[#allocation2 + $0x5c0] sm:$0xff]
    %v238 = vld [vmem:[#allocation2 + $0x5c8] sm:$0xff]
    %v239 = vld [vmem:[#allocation2 + $0x5d0] sm:$0xff]
    %v240 = vld [vmem:[#allocation2 + $0x5d8] sm:$0xff]
    %v241 = vld [vmem:[#allocation2 + $0x5e0] sm:$0xff]
    %v242 = vld [vmem:[#allocation2 + $0x5e8] sm:$0xff]
    %v243 = vld [vmem:[#allocation2 + $0x5f0] sm:$0xff]
    %v244 = vld [vmem:[#allocation2 + $0x5f8] sm:$0xff]
    %v245 = vld [vmem:[%s2] sm:$0xf]
    %v247 = vlaneseq
    %v248 = vshrl.u32 %v247, 7
    %v249 = vsub.s32 0, %v248
    %v250 = vrot.slane %v245, %v249
    %v251 = vlaneseq
    %v252 = vshrl.u32 %v251, 7
    %v253 = vsub.s32 1, %v252
    %v254 = vrot.slane %v245, %v253
    %v255 = vlaneseq
    %v256 = vshrl.u32 %v255, 7
    %v257 = vsub.s32 2, %v256
    %v258 = vrot.slane %v245, %v257
    %v259 = vlaneseq
    %v260 = vshrl.u32 %v259, 7
    %v261 = vsub.s32 3, %v260
    %v262 = vrot.slane %v245, %v261
    %v270 = vunpack.c.l.b16 %v50
    %v271 = vunpack.c.h.b16 %v50
    %v272 = vunpack.c.l.b16 %v51
    %v273 = vunpack.c.h.b16 %v51
    %v274 = vunpack.c.l.b16 %v52
    %v275 = vunpack.c.h.b16 %v52
    %v276 = vpack.c.b16 %v270, %v270
    %v277 = vpack.c.b16 %v271, %v271
    %v278 = vpack.c.b16 %v272, %v272
    %v279 = vpack.c.b16 %v273, %v273
    %v280 = vpack.c.b16 %v274, %v274
    %v281 = vpack.c.b16 %v275, %v275
    %v480 = vunpack.c.l.b16 %v53
    %v481 = vunpack.c.h.b16 %v53
    %v482 = vunpack.c.l.b16 %v54
    %v483 = vunpack.c.h.b16 %v54
    %v484 = vunpack.c.l.b16 %v55
    %v485 = vunpack.c.h.b16 %v55
    %v486 = vunpack.c.l.b16 %v56
    %v487 = vunpack.c.h.b16 %v56
    %v488 = vunpack.c.l.b16 %v57
    %v489 = vunpack.c.h.b16 %v57
    %v490 = vunpack.c.l.b16 %v58
    %v491 = vunpack.c.h.b16 %v58
    %v492 = vunpack.c.l.b16 %v59
    %v493 = vunpack.c.h.b16 %v59
    %v494 = vunpack.c.l.b16 %v60
    %v495 = vunpack.c.h.b16 %v60
    %v496 = vunpack.c.l.b16 %v61
    %v497 = vunpack.c.h.b16 %v61
    %v498 = vunpack.c.l.b16 %v62
    %v499 = vunpack.c.h.b16 %v62
    %v500 = vunpack.c.l.b16 %v63
    %v501 = vunpack.c.h.b16 %v63
    %v502 = vunpack.c.l.b16 %v64
    %v503 = vunpack.c.h.b16 %v64
    %v504 = vunpack.c.l.b16 %v65
    %v505 = vunpack.c.h.b16 %v65
    %v506 = vunpack.c.l.b16 %v66
    %v507 = vunpack.c.h.b16 %v66
    %v508 = vunpack.c.l.b16 %v67
    %v509 = vunpack.c.h.b16 %v67
    %v510 = vunpack.c.l.b16 %v68
    %v511 = vunpack.c.h.b16 %v68
    %v512 = vunpack.c.l.b16 %v69
    %v513 = vunpack.c.h.b16 %v69
    %v514 = vunpack.c.l.b16 %v70
    %v515 = vunpack.c.h.b16 %v70
    %v516 = vunpack.c.l.b16 %v71
    %v517 = vunpack.c.h.b16 %v71
    %v518 = vunpack.c.l.b16 %v72
    %v519 = vunpack.c.h.b16 %v72
    %v520 = vunpack.c.l.b16 %v73
    %v521 = vunpack.c.h.b16 %v73
    %v522 = vunpack.c.l.b16 %v74
    %v523 = vunpack.c.h.b16 %v74
    %v524 = vunpack.c.l.b16 %v75
    %v525 = vunpack.c.h.b16 %v75
    %v526 = vunpack.c.l.b16 %v76
    %v527 = vunpack.c.h.b16 %v76
    %v528 = vunpack.c.l.b16 %v77
    %v529 = vunpack.c.h.b16 %v77
    %v530 = vunpack.c.l.b16 %v78
    %v531 = vunpack.c.h.b16 %v78
    %v532 = vunpack.c.l.b16 %v79
    %v533 = vunpack.c.h.b16 %v79
    %v534 = vunpack.c.l.b16 %v80
    %v535 = vunpack.c.h.b16 %v80
    %v536 = vunpack.c.l.b16 %v81
    %v537 = vunpack.c.h.b16 %v81
    %v538 = vunpack.c.l.b16 %v82
    %v539 = vunpack.c.h.b16 %v82
    %v540 = vunpack.c.l.b16 %v83
    %v541 = vunpack.c.h.b16 %v83
    %v542 = vunpack.c.l.b16 %v84
    %v543 = vunpack.c.h.b16 %v84
    %v544 = vunpack.c.l.b16 %v85
    %v545 = vunpack.c.h.b16 %v85
    %v546 = vunpack.c.l.b16 %v86
    %v547 = vunpack.c.h.b16 %v86
    %v548 = vunpack.c.l.b16 %v87
    %v549 = vunpack.c.h.b16 %v87
    %v550 = vunpack.c.l.b16 %v88
    %v551 = vunpack.c.h.b16 %v88
    %v552 = vunpack.c.l.b16 %v89
    %v553 = vunpack.c.h.b16 %v89
    %v554 = vunpack.c.l.b16 %v90
    %v555 = vunpack.c.h.b16 %v90
    %v556 = vunpack.c.l.b16 %v91
    %v557 = vunpack.c.h.b16 %v91
    %v558 = vunpack.c.l.b16 %v92
    %v559 = vunpack.c.h.b16 %v92
    %v560 = vunpack.c.l.b16 %v93
    %v561 = vunpack.c.h.b16 %v93
    %v562 = vunpack.c.l.b16 %v94
    %v563 = vunpack.c.h.b16 %v94
    %v564 = vunpack.c.l.b16 %v95
    %v565 = vunpack.c.h.b16 %v95
    %v566 = vunpack.c.l.b16 %v96
    %v567 = vunpack.c.h.b16 %v96
    %v568 = vunpack.c.l.b16 %v97
    %v569 = vunpack.c.h.b16 %v97
    %v570 = vunpack.c.l.b16 %v98
    %v571 = vunpack.c.h.b16 %v98
    %v572 = vunpack.c.l.b16 %v99
    %v573 = vunpack.c.h.b16 %v99
    %v574 = vunpack.c.l.b16 %v100
    %v575 = vunpack.c.h.b16 %v100
    %v576 = vunpack.c.l.b16 %v101
    %v577 = vunpack.c.h.b16 %v101
    %v578 = vunpack.c.l.b16 %v102
    %v579 = vunpack.c.h.b16 %v102
    %v580 = vunpack.c.l.b16 %v103
    %v581 = vunpack.c.h.b16 %v103
    %v582 = vunpack.c.l.b16 %v104
    %v583 = vunpack.c.h.b16 %v104
    %v584 = vunpack.c.l.b16 %v105
    %v585 = vunpack.c.h.b16 %v105
    %v586 = vunpack.c.l.b16 %v106
    %v587 = vunpack.c.h.b16 %v106
    %v588 = vunpack.c.l.b16 %v107
    %v589 = vunpack.c.h.b16 %v107
    %v590 = vunpack.c.l.b16 %v108
    %v591 = vunpack.c.h.b16 %v108
    %v592 = vunpack.c.l.b16 %v109
    %v593 = vunpack.c.h.b16 %v109
    %v594 = vunpack.c.l.b16 %v110
    %v595 = vunpack.c.h.b16 %v110
    %v596 = vunpack.c.l.b16 %v111
    %v597 = vunpack.c.h.b16 %v111
    %v598 = vunpack.c.l.b16 %v112
    %v599 = vunpack.c.h.b16 %v112
    %v600 = vunpack.c.l.b16 %v113
    %v601 = vunpack.c.h.b16 %v113
    %v602 = vunpack.c.l.b16 %v114
    %v603 = vunpack.c.h.b16 %v114
    %v604 = vunpack.c.l.b16 %v115
    %v605 = vunpack.c.h.b16 %v115
    %v606 = vunpack.c.l.b16 %v116
    %v607 = vunpack.c.h.b16 %v116
    %v608 = vunpack.c.l.b16 %v117
    %v609 = vunpack.c.h.b16 %v117
    %v610 = vunpack.c.l.b16 %v118
    %v611 = vunpack.c.h.b16 %v118
    %v612 = vunpack.c.l.b16 %v119
    %v613 = vunpack.c.h.b16 %v119
    %v614 = vunpack.c.l.b16 %v120
    %v615 = vunpack.c.h.b16 %v120
    %v616 = vunpack.c.l.b16 %v121
    %v617 = vunpack.c.h.b16 %v121
    %v618 = vunpack.c.l.b16 %v122
    %v619 = vunpack.c.h.b16 %v122
    %v620 = vunpack.c.l.b16 %v123
    %v621 = vunpack.c.h.b16 %v123
    %v622 = vunpack.c.l.b16 %v124
    %v623 = vunpack.c.h.b16 %v124
    %v624 = vunpack.c.l.b16 %v125
    %v625 = vunpack.c.h.b16 %v125
    %v626 = vunpack.c.l.b16 %v126
    %v627 = vunpack.c.h.b16 %v126
    %v628 = vunpack.c.l.b16 %v127
    %v629 = vunpack.c.h.b16 %v127
    %v630 = vunpack.c.l.b16 %v128
    %v631 = vunpack.c.h.b16 %v128
    %v632 = vunpack.c.l.b16 %v129
    %v633 = vunpack.c.h.b16 %v129
    %v634 = vunpack.c.l.b16 %v130
    %v635 = vunpack.c.h.b16 %v130
    %v636 = vunpack.c.l.b16 %v131
    %v637 = vunpack.c.h.b16 %v131
    %v638 = vunpack.c.l.b16 %v132
    %v639 = vunpack.c.h.b16 %v132
    %v640 = vunpack.c.l.b16 %v133
    %v641 = vunpack.c.h.b16 %v133
    %v642 = vunpack.c.l.b16 %v134
    %v643 = vunpack.c.h.b16 %v134
    %v644 = vunpack.c.l.b16 %v135
    %v645 = vunpack.c.h.b16 %v135
    %v646 = vunpack.c.l.b16 %v136
    %v647 = vunpack.c.h.b16 %v136
    %v648 = vunpack.c.l.b16 %v137
    %v649 = vunpack.c.h.b16 %v137
    %v650 = vunpack.c.l.b16 %v138
    %v651 = vunpack.c.h.b16 %v138
    %v652 = vunpack.c.l.b16 %v139
    %v653 = vunpack.c.h.b16 %v139
    %v654 = vunpack.c.l.b16 %v140
    %v655 = vunpack.c.h.b16 %v140
    %v656 = vunpack.c.l.b16 %v141
    %v657 = vunpack.c.h.b16 %v141
    %v658 = vunpack.c.l.b16 %v142
    %v659 = vunpack.c.h.b16 %v142
    %v660 = vunpack.c.l.b16 %v143
    %v661 = vunpack.c.h.b16 %v143
    %v662 = vunpack.c.l.b16 %v144
    %v663 = vunpack.c.h.b16 %v144
    %v664 = vunpack.c.l.b16 %v145
    %v665 = vunpack.c.h.b16 %v145
    %v666 = vunpack.c.l.b16 %v146
    %v667 = vunpack.c.h.b16 %v146
    %v668 = vunpack.c.l.b16 %v147
    %v669 = vunpack.c.h.b16 %v147
    %v670 = vunpack.c.l.b16 %v148
    %v671 = vunpack.c.h.b16 %v148
    %v672 = vunpack.c.l.b16 %v149
    %v673 = vunpack.c.h.b16 %v149
    %v674 = vunpack.c.l.b16 %v150
    %v675 = vunpack.c.h.b16 %v150
    %v676 = vunpack.c.l.b16 %v151
    %v677 = vunpack.c.h.b16 %v151
    %v678 = vunpack.c.l.b16 %v152
    %v679 = vunpack.c.h.b16 %v152
    %v680 = vunpack.c.l.b16 %v153
    %v681 = vunpack.c.h.b16 %v153
    %v682 = vunpack.c.l.b16 %v154
    %v683 = vunpack.c.h.b16 %v154
    %v684 = vunpack.c.l.b16 %v155
    %v685 = vunpack.c.h.b16 %v155
    %v686 = vunpack.c.l.b16 %v156
    %v687 = vunpack.c.h.b16 %v156
    %v688 = vunpack.c.l.b16 %v157
    %v689 = vunpack.c.h.b16 %v157
    %v690 = vunpack.c.l.b16 %v158
    %v691 = vunpack.c.h.b16 %v158
    %v692 = vunpack.c.l.b16 %v159
    %v693 = vunpack.c.h.b16 %v159
    %v694 = vunpack.c.l.b16 %v160
    %v695 = vunpack.c.h.b16 %v160
    %v696 = vunpack.c.l.b16 %v161
    %v697 = vunpack.c.h.b16 %v161
    %v698 = vunpack.c.l.b16 %v162
    %v699 = vunpack.c.h.b16 %v162
    %v700 = vunpack.c.l.b16 %v163
    %v701 = vunpack.c.h.b16 %v163
    %v702 = vunpack.c.l.b16 %v164
    %v703 = vunpack.c.h.b16 %v164
    %v704 = vunpack.c.l.b16 %v165
    %v705 = vunpack.c.h.b16 %v165
    %v706 = vunpack.c.l.b16 %v166
    %v707 = vunpack.c.h.b16 %v166
    %v708 = vunpack.c.l.b16 %v167
    %v709 = vunpack.c.h.b16 %v167
    %v710 = vunpack.c.l.b16 %v168
    %v711 = vunpack.c.h.b16 %v168
    %v712 = vunpack.c.l.b16 %v169
    %v713 = vunpack.c.h.b16 %v169
    %v714 = vunpack.c.l.b16 %v170
    %v715 = vunpack.c.h.b16 %v170
    %v716 = vunpack.c.l.b16 %v171
    %v717 = vunpack.c.h.b16 %v171
    %v718 = vunpack.c.l.b16 %v172
    %v719 = vunpack.c.h.b16 %v172
    %v720 = vunpack.c.l.b16 %v173
    %v721 = vunpack.c.h.b16 %v173
    %v722 = vunpack.c.l.b16 %v174
    %v723 = vunpack.c.h.b16 %v174
    %v724 = vunpack.c.l.b16 %v175
    %v725 = vunpack.c.h.b16 %v175
    %v726 = vunpack.c.l.b16 %v176
    %v727 = vunpack.c.h.b16 %v176
    %v728 = vunpack.c.l.b16 %v177
    %v729 = vunpack.c.h.b16 %v177
    %v730 = vunpack.c.l.b16 %v178
    %v731 = vunpack.c.h.b16 %v178
    %v732 = vunpack.c.l.b16 %v179
    %v733 = vunpack.c.h.b16 %v179
    %v734 = vunpack.c.l.b16 %v180
    %v735 = vunpack.c.h.b16 %v180
    %v736 = vunpack.c.l.b16 %v181
    %v737 = vunpack.c.h.b16 %v181
    %v738 = vunpack.c.l.b16 %v182
    %v739 = vunpack.c.h.b16 %v182
    %v740 = vunpack.c.l.b16 %v183
    %v741 = vunpack.c.h.b16 %v183
    %v742 = vunpack.c.l.b16 %v184
    %v743 = vunpack.c.h.b16 %v184
    %v744 = vunpack.c.l.b16 %v185
    %v745 = vunpack.c.h.b16 %v185
    %v746 = vunpack.c.l.b16 %v186
    %v747 = vunpack.c.h.b16 %v186
    %v748 = vunpack.c.l.b16 %v187
    %v749 = vunpack.c.h.b16 %v187
    %v750 = vunpack.c.l.b16 %v188
    %v751 = vunpack.c.h.b16 %v188
    %v752 = vunpack.c.l.b16 %v189
    %v753 = vunpack.c.h.b16 %v189
    %v754 = vunpack.c.l.b16 %v190
    %v755 = vunpack.c.h.b16 %v190
    %v756 = vunpack.c.l.b16 %v191
    %v757 = vunpack.c.h.b16 %v191
    %v758 = vunpack.c.l.b16 %v192
    %v759 = vunpack.c.h.b16 %v192
    %v760 = vunpack.c.l.b16 %v193
    %v761 = vunpack.c.h.b16 %v193
    %v762 = vunpack.c.l.b16 %v194
    %v763 = vunpack.c.h.b16 %v194
    %v764 = vunpack.c.l.b16 %v195
    %v765 = vunpack.c.h.b16 %v195
    %v766 = vunpack.c.l.b16 %v196
    %v767 = vunpack.c.h.b16 %v196
    %v768 = vunpack.c.l.b16 %v197
    %v769 = vunpack.c.h.b16 %v197
    %v770 = vunpack.c.l.b16 %v198
    %v771 = vunpack.c.h.b16 %v198
    %v772 = vunpack.c.l.b16 %v199
    %v773 = vunpack.c.h.b16 %v199
    %v774 = vunpack.c.l.b16 %v200
    %v775 = vunpack.c.h.b16 %v200
    %v776 = vunpack.c.l.b16 %v201
    %v777 = vunpack.c.h.b16 %v201
    %v778 = vunpack.c.l.b16 %v202
    %v779 = vunpack.c.h.b16 %v202
    %v780 = vunpack.c.l.b16 %v203
    %v781 = vunpack.c.h.b16 %v203
    %v782 = vunpack.c.l.b16 %v204
    %v783 = vunpack.c.h.b16 %v204
    %v784 = vunpack.c.l.b16 %v205
    %v785 = vunpack.c.h.b16 %v205
    %v786 = vunpack.c.l.b16 %v206
    %v787 = vunpack.c.h.b16 %v206
    %v788 = vunpack.c.l.b16 %v207
    %v789 = vunpack.c.h.b16 %v207
    %v790 = vunpack.c.l.b16 %v208
    %v791 = vunpack.c.h.b16 %v208
    %v792 = vunpack.c.l.b16 %v209
    %v793 = vunpack.c.h.b16 %v209
    %v794 = vunpack.c.l.b16 %v210
    %v795 = vunpack.c.h.b16 %v210
    %v796 = vunpack.c.l.b16 %v211
    %v797 = vunpack.c.h.b16 %v211
    %v798 = vunpack.c.l.b16 %v212
    %v799 = vunpack.c.h.b16 %v212
    %v800 = vunpack.c.l.b16 %v213
    %v801 = vunpack.c.h.b16 %v213
    %v802 = vunpack.c.l.b16 %v214
    %v803 = vunpack.c.h.b16 %v214
    %v804 = vunpack.c.l.b16 %v215
    %v805 = vunpack.c.h.b16 %v215
    %v806 = vunpack.c.l.b16 %v216
    %v807 = vunpack.c.h.b16 %v216
    %v808 = vunpack.c.l.b16 %v217
    %v809 = vunpack.c.h.b16 %v217
    %v810 = vunpack.c.l.b16 %v218
    %v811 = vunpack.c.h.b16 %v218
    %v812 = vunpack.c.l.b16 %v219
    %v813 = vunpack.c.h.b16 %v219
    %v814 = vunpack.c.l.b16 %v220
    %v815 = vunpack.c.h.b16 %v220
    %v816 = vunpack.c.l.b16 %v221
    %v817 = vunpack.c.h.b16 %v221
    %v818 = vunpack.c.l.b16 %v222
    %v819 = vunpack.c.h.b16 %v222
    %v820 = vunpack.c.l.b16 %v223
    %v821 = vunpack.c.h.b16 %v223
    %v822 = vunpack.c.l.b16 %v224
    %v823 = vunpack.c.h.b16 %v224
    %v824 = vunpack.c.l.b16 %v225
    %v825 = vunpack.c.h.b16 %v225
    %v826 = vunpack.c.l.b16 %v226
    %v827 = vunpack.c.h.b16 %v226
    %v828 = vunpack.c.l.b16 %v227
    %v829 = vunpack.c.h.b16 %v227
    %v830 = vunpack.c.l.b16 %v228
    %v831 = vunpack.c.h.b16 %v228
    %v832 = vunpack.c.l.b16 %v229
    %v833 = vunpack.c.h.b16 %v229
    %v834 = vunpack.c.l.b16 %v230
    %v835 = vunpack.c.h.b16 %v230
    %v836 = vunpack.c.l.b16 %v231
    %v837 = vunpack.c.h.b16 %v231
    %v838 = vunpack.c.l.b16 %v232
    %v839 = vunpack.c.h.b16 %v232
    %v840 = vunpack.c.l.b16 %v233
    %v841 = vunpack.c.h.b16 %v233
    %v842 = vunpack.c.l.b16 %v234
    %v843 = vunpack.c.h.b16 %v234
    %v844 = vunpack.c.l.b16 %v235
    %v845 = vunpack.c.h.b16 %v235
    %v846 = vunpack.c.l.b16 %v236
    %v847 = vunpack.c.h.b16 %v236
    %v848 = vunpack.c.l.b16 %v237
    %v849 = vunpack.c.h.b16 %v237
    %v850 = vunpack.c.l.b16 %v238
    %v851 = vunpack.c.h.b16 %v238
    %v852 = vunpack.c.l.b16 %v239
    %v853 = vunpack.c.h.b16 %v239
    %v854 = vunpack.c.l.b16 %v240
    %v855 = vunpack.c.h.b16 %v240
    %v856 = vunpack.c.l.b16 %v241
    %v857 = vunpack.c.h.b16 %v241
    %v858 = vunpack.c.l.b16 %v242
    %v859 = vunpack.c.h.b16 %v242
    %v860 = vunpack.c.l.b16 %v243
    %v861 = vunpack.c.h.b16 %v243
    %v862 = vunpack.c.l.b16 %v244
    %v863 = vunpack.c.h.b16 %v244
    %v864 = vpack.c.b16 %v484, %v480
    %v865 = vpack.c.b16 %v485, %v481
    %v866 = vpack.c.b16 %v486, %v482
    %v867 = vpack.c.b16 %v487, %v483
    %v868 = vpack.c.b16 %v492, %v488
    %v869 = vpack.c.b16 %v493, %v489
    %v870 = vpack.c.b16 %v494, %v490
    %v871 = vpack.c.b16 %v495, %v491
    %v872 = vpack.c.b16 %v500, %v496
    %v873 = vpack.c.b16 %v501, %v497
    %v874 = vpack.c.b16 %v502, %v498
    %v875 = vpack.c.b16 %v503, %v499
    %v876 = vpack.c.b16 %v508, %v504
    %v877 = vpack.c.b16 %v509, %v505
    %v878 = vpack.c.b16 %v510, %v506
    %v879 = vpack.c.b16 %v511, %v507
    %v880 = vpack.c.b16 %v516, %v512
    %v881 = vpack.c.b16 %v517, %v513
    %v882 = vpack.c.b16 %v518, %v514
    %v883 = vpack.c.b16 %v519, %v515
    %v884 = vpack.c.b16 %v524, %v520
    %v885 = vpack.c.b16 %v525, %v521
    %v886 = vpack.c.b16 %v526, %v522
    %v887 = vpack.c.b16 %v527, %v523
    %v888 = vpack.c.b16 %v532, %v528
    %v889 = vpack.c.b16 %v533, %v529
    %v890 = vpack.c.b16 %v534, %v530
    %v891 = vpack.c.b16 %v535, %v531
    %v892 = vpack.c.b16 %v540, %v536
    %v893 = vpack.c.b16 %v541, %v537
    %v894 = vpack.c.b16 %v542, %v538
    %v895 = vpack.c.b16 %v543, %v539
    %v896 = vpack.c.b16 %v548, %v544
    %v897 = vpack.c.b16 %v549, %v545
    %v898 = vpack.c.b16 %v550, %v546
    %v899 = vpack.c.b16 %v551, %v547
    %v900 = vpack.c.b16 %v556, %v552
    %v901 = vpack.c.b16 %v557, %v553
    %v902 = vpack.c.b16 %v558, %v554
    %v903 = vpack.c.b16 %v559, %v555
    %v904 = vpack.c.b16 %v564, %v560
    %v905 = vpack.c.b16 %v565, %v561
    %v906 = vpack.c.b16 %v566, %v562
    %v907 = vpack.c.b16 %v567, %v563
    %v908 = vpack.c.b16 %v572, %v568
    %v909 = vpack.c.b16 %v573, %v569
    %v910 = vpack.c.b16 %v574, %v570
    %v911 = vpack.c.b16 %v575, %v571
    %v912 = vpack.c.b16 %v580, %v576
    %v913 = vpack.c.b16 %v581, %v577
    %v914 = vpack.c.b16 %v582, %v578
    %v915 = vpack.c.b16 %v583, %v579
    %v916 = vpack.c.b16 %v588, %v584
    %v917 = vpack.c.b16 %v589, %v585
    %v918 = vpack.c.b16 %v590, %v586
    %v919 = vpack.c.b16 %v591, %v587
    %v920 = vpack.c.b16 %v596, %v592
    %v921 = vpack.c.b16 %v597, %v593
    %v922 = vpack.c.b16 %v598, %v594
    %v923 = vpack.c.b16 %v599, %v595
    %v924 = vpack.c.b16 %v604, %v600
    %v925 = vpack.c.b16 %v605, %v601
    %v926 = vpack.c.b16 %v606, %v602
    %v927 = vpack.c.b16 %v607, %v603
    %v928 = vpack.c.b16 %v612, %v608
    %v929 = vpack.c.b16 %v613, %v609
    %v930 = vpack.c.b16 %v614, %v610
    %v931 = vpack.c.b16 %v615, %v611
    %v932 = vpack.c.b16 %v620, %v616
    %v933 = vpack.c.b16 %v621, %v617
    %v934 = vpack.c.b16 %v622, %v618
    %v935 = vpack.c.b16 %v623, %v619
    %v936 = vpack.c.b16 %v628, %v624
    %v937 = vpack.c.b16 %v629, %v625
    %v938 = vpack.c.b16 %v630, %v626
    %v939 = vpack.c.b16 %v631, %v627
    %v940 = vpack.c.b16 %v636, %v632
    %v941 = vpack.c.b16 %v637, %v633
    %v942 = vpack.c.b16 %v638, %v634
    %v943 = vpack.c.b16 %v639, %v635
    %v944 = vpack.c.b16 %v644, %v640
    %v945 = vpack.c.b16 %v645, %v641
    %v946 = vpack.c.b16 %v646, %v642
    %v947 = vpack.c.b16 %v647, %v643
    %v948 = vpack.c.b16 %v652, %v648
    %v949 = vpack.c.b16 %v653, %v649
    %v950 = vpack.c.b16 %v654, %v650
    %v951 = vpack.c.b16 %v655, %v651
    %v952 = vpack.c.b16 %v660, %v656
    %v953 = vpack.c.b16 %v661, %v657
    %v954 = vpack.c.b16 %v662, %v658
    %v955 = vpack.c.b16 %v663, %v659
    %v956 = vpack.c.b16 %v668, %v664
    %v957 = vpack.c.b16 %v669, %v665
    %v958 = vpack.c.b16 %v670, %v666
    %v959 = vpack.c.b16 %v671, %v667
    %v960 = vpack.c.b16 %v676, %v672
    %v961 = vpack.c.b16 %v677, %v673
    %v962 = vpack.c.b16 %v678, %v674
    %v963 = vpack.c.b16 %v679, %v675
    %v964 = vpack.c.b16 %v684, %v680
    %v965 = vpack.c.b16 %v685, %v681
    %v966 = vpack.c.b16 %v686, %v682
    %v967 = vpack.c.b16 %v687, %v683
    %v968 = vpack.c.b16 %v692, %v688
    %v969 = vpack.c.b16 %v693, %v689
    %v970 = vpack.c.b16 %v694, %v690
    %v971 = vpack.c.b16 %v695, %v691
    %v972 = vpack.c.b16 %v700, %v696
    %v973 = vpack.c.b16 %v701, %v697
    %v974 = vpack.c.b16 %v702, %v698
    %v975 = vpack.c.b16 %v703, %v699
    %v976 = vpack.c.b16 %v708, %v704
    %v977 = vpack.c.b16 %v709, %v705
    %v978 = vpack.c.b16 %v710, %v706
    %v979 = vpack.c.b16 %v711, %v707
    %v980 = vpack.c.b16 %v716, %v712
    %v981 = vpack.c.b16 %v717, %v713
    %v982 = vpack.c.b16 %v718, %v714
    %v983 = vpack.c.b16 %v719, %v715
    %v984 = vpack.c.b16 %v724, %v720
    %v985 = vpack.c.b16 %v725, %v721
    %v986 = vpack.c.b16 %v726, %v722
    %v987 = vpack.c.b16 %v727, %v723
    %v988 = vpack.c.b16 %v732, %v728
    %v989 = vpack.c.b16 %v733, %v729
    %v990 = vpack.c.b16 %v734, %v730
    %v991 = vpack.c.b16 %v735, %v731
    %v992 = vpack.c.b16 %v740, %v736
    %v993 = vpack.c.b16 %v741, %v737
    %v994 = vpack.c.b16 %v742, %v738
    %v995 = vpack.c.b16 %v743, %v739
    %v996 = vpack.c.b16 %v748, %v744
    %v997 = vpack.c.b16 %v749, %v745
    %v998 = vpack.c.b16 %v750, %v746
    %v999 = vpack.c.b16 %v751, %v747
    %v1000 = vpack.c.b16 %v756, %v752
    %v1001 = vpack.c.b16 %v757, %v753
    %v1002 = vpack.c.b16 %v758, %v754
    %v1003 = vpack.c.b16 %v759, %v755
    %v1004 = vpack.c.b16 %v764, %v760
    %v1005 = vpack.c.b16 %v765, %v761
    %v1006 = vpack.c.b16 %v766, %v762
    %v1007 = vpack.c.b16 %v767, %v763
    %v1008 = vpack.c.b16 %v772, %v768
    %v1009 = vpack.c.b16 %v773, %v769
    %v1010 = vpack.c.b16 %v774, %v770
    %v1011 = vpack.c.b16 %v775, %v771
    %v1012 = vpack.c.b16 %v780, %v776
    %v1013 = vpack.c.b16 %v781, %v777
    %v1014 = vpack.c.b16 %v782, %v778
    %v1015 = vpack.c.b16 %v783, %v779
    %v1016 = vpack.c.b16 %v788, %v784
    %v1017 = vpack.c.b16 %v789, %v785
    %v1018 = vpack.c.b16 %v790, %v786
    %v1019 = vpack.c.b16 %v791, %v787
    %v1020 = vpack.c.b16 %v796, %v792
    %v1021 = vpack.c.b16 %v797, %v793
    %v1022 = vpack.c.b16 %v798, %v794
    %v1023 = vpack.c.b16 %v799, %v795
    %v1024 = vpack.c.b16 %v804, %v800
    %v1025 = vpack.c.b16 %v805, %v801
    %v1026 = vpack.c.b16 %v806, %v802
    %v1027 = vpack.c.b16 %v807, %v803
    %v1028 = vpack.c.b16 %v812, %v808
    %v1029 = vpack.c.b16 %v813, %v809
    %v1030 = vpack.c.b16 %v814, %v810
    %v1031 = vpack.c.b16 %v815, %v811
    %v1032 = vpack.c.b16 %v820, %v816
    %v1033 = vpack.c.b16 %v821, %v817
    %v1034 = vpack.c.b16 %v822, %v818
    %v1035 = vpack.c.b16 %v823, %v819
    %v1036 = vpack.c.b16 %v828, %v824
    %v1037 = vpack.c.b16 %v829, %v825
    %v1038 = vpack.c.b16 %v830, %v826
    %v1039 = vpack.c.b16 %v831, %v827
    %v1040 = vpack.c.b16 %v836, %v832
    %v1041 = vpack.c.b16 %v837, %v833
    %v1042 = vpack.c.b16 %v838, %v834
    %v1043 = vpack.c.b16 %v839, %v835
    %v1044 = vpack.c.b16 %v844, %v840
    %v1045 = vpack.c.b16 %v845, %v841
    %v1046 = vpack.c.b16 %v846, %v842
    %v1047 = vpack.c.b16 %v847, %v843
    %v1048 = vpack.c.b16 %v852, %v848
    %v1049 = vpack.c.b16 %v853, %v849
    %v1050 = vpack.c.b16 %v854, %v850
    %v1051 = vpack.c.b16 %v855, %v851
    %v1052 = vpack.c.b16 %v860, %v856
    %v1053 = vpack.c.b16 %v861, %v857
    %v1054 = vpack.c.b16 %v862, %v858
    %v1055 = vpack.c.b16 %v863, %v859
    %1248 = vmatprep.subr.bf16.mxu0 %v893
    %1249 = vmatpush1.bf16.msra.mxu0 %v892
    %1250 = vmatprep.subr.bf16.mxu0 %v889
    %1251 = vmatpush1.bf16.msra.mxu0 %v888
    %1252 = vmatprep.subr.bf16.mxu0 %v885
    %1253 = vmatpush1.bf16.msra.mxu0 %v884
    %1254 = vmatprep.subr.bf16.mxu0 %v881
    %1255 = vmatpush1.bf16.msra.mxu0 %v880
    %1256 = vmatprep.subr.bf16.mxu0 %v877
    %1257 = vmatpush1.bf16.msra.mxu0 %v876
    %1258 = vmatprep.subr.bf16.mxu0 %v873
    %1259 = vmatpush1.bf16.msra.mxu0 %v872
    %1260 = vmatprep.subr.bf16.mxu0 %v869
    %1261 = vmatpush1.bf16.msra.mxu0 %v868
    %1262 = vmatprep.subr.bf16.mxu0 %v865
    %1263 = vmatpush1.bf16.msra.mxu0 %v864
    %1264 = vmatprep.subr.bf16.mxu0 %v925
    %1265 = vmatpush2.bf16.msra.mxu0 %v924
    %1266 = vmatprep.subr.bf16.mxu0 %v921
    %1267 = vmatpush2.bf16.msra.mxu0 %v920
    %1268 = vmatprep.subr.bf16.mxu0 %v917
    %1269 = vmatpush2.bf16.msra.mxu0 %v916
    %1270 = vmatprep.subr.bf16.mxu0 %v913
    %1271 = vmatpush2.bf16.msra.mxu0 %v912
    %1272 = vmatprep.subr.bf16.mxu0 %v909
    %1273 = vmatpush2.bf16.msra.mxu0 %v908
    %1274 = vmatprep.subr.bf16.mxu0 %v905
    %1275 = vmatpush2.bf16.msra.mxu0 %v904
    %1276 = vmatprep.subr.bf16.mxu0 %v901
    %1277 = vmatpush2.bf16.msra.mxu0 %v900
    %1278 = vmatprep.subr.bf16.mxu0 %v897
    %1279 = vmatpush2.bf16.msra.mxu0 %v896
    %1280 = vmatprep.mubr.bf16.mxu0 %v277
    %1281 = vmatmul.mubr.bf16.gmra.mxu0 %v276
    %v1282 = vpop.f32.mrf.mxu0
    %v1283 = vadd.f32 %v250, %v1282
    %v1284 = vpop.f32.mrf.mxu0
    %v1285 = vadd.f32 %v254, %v1284
    %v1286 = vpop.f32.mrf.mxu0
    %v1287 = vpop.f32.mrf.mxu0
    %1288 = vdwg.mxu0
    %1289 = vmatprep.subr.bf16.mxu0 %v957
    %1290 = vmatpush1.bf16.msra.mxu0 %v956
    %1291 = vmatprep.subr.bf16.mxu0 %v953
    %1292 = vmatpush1.bf16.msra.mxu0 %v952
    %1293 = vmatprep.subr.bf16.mxu0 %v949
    %1294 = vmatpush1.bf16.msra.mxu0 %v948
    %1295 = vmatprep.subr.bf16.mxu0 %v945
    %1296 = vmatpush1.bf16.msra.mxu0 %v944
    %1297 = vmatprep.subr.bf16.mxu0 %v941
    %1298 = vmatpush1.bf16.msra.mxu0 %v940
    %1299 = vmatprep.subr.bf16.mxu0 %v937
    %1300 = vmatpush1.bf16.msra.mxu0 %v936
    %1301 = vmatprep.subr.bf16.mxu0 %v933
    %1302 = vmatpush1.bf16.msra.mxu0 %v932
    %1303 = vmatprep.subr.bf16.mxu0 %v929
    %1304 = vmatpush1.bf16.msra.mxu0 %v928
    %1305 = vmatprep.subr.bf16.mxu0 %v989
    %1306 = vmatpush2.bf16.msra.mxu0 %v988
    %1307 = vmatprep.subr.bf16.mxu0 %v985
    %1308 = vmatpush2.bf16.msra.mxu0 %v984
    %1309 = vmatprep.subr.bf16.mxu0 %v981
    %1310 = vmatpush2.bf16.msra.mxu0 %v980
    %1311 = vmatprep.subr.bf16.mxu0 %v977
    %1312 = vmatpush2.bf16.msra.mxu0 %v976
    %1313 = vmatprep.subr.bf16.mxu0 %v973
    %1314 = vmatpush2.bf16.msra.mxu0 %v972
    %1315 = vmatprep.subr.bf16.mxu0 %v969
    %1316 = vmatpush2.bf16.msra.mxu0 %v968
    %1317 = vmatprep.subr.bf16.mxu0 %v965
    %1318 = vmatpush2.bf16.msra.mxu0 %v964
    %1319 = vmatprep.subr.bf16.mxu0 %v961
    %1320 = vmatpush2.bf16.msra.mxu0 %v960
    %1321 = vmatprep.mubr.bf16.mxu0 %v279
    %1322 = vmatmul.mubr.bf16.gmra.mxu0 %v278
    %v1323 = vpop.f32.mrf.mxu0
    %v1324 = vadd.f32 %v1283, %v1323
    %v1325 = vpop.f32.mrf.mxu0
    %v1326 = vadd.f32 %v1285, %v1325
    %v1327 = vpop.f32.mrf.mxu0
    %v1328 = vpop.f32.mrf.mxu0
    %1329 = vdwg.mxu0
    %1330 = vmatprep.subr.bf16.mxu0 %v1021
    %1331 = vmatpush1.bf16.msra.mxu0 %v1020
    %1332 = vmatprep.subr.bf16.mxu0 %v1017
    %1333 = vmatpush1.bf16.msra.mxu0 %v1016
    %1334 = vmatprep.subr.bf16.mxu0 %v1013
    %1335 = vmatpush1.bf16.msra.mxu0 %v1012
    %1336 = vmatprep.subr.bf16.mxu0 %v1009
    %1337 = vmatpush1.bf16.msra.mxu0 %v1008
    %1338 = vmatprep.subr.bf16.mxu0 %v1005
    %1339 = vmatpush1.bf16.msra.mxu0 %v1004
    %1340 = vmatprep.subr.bf16.mxu0 %v1001
    %1341 = vmatpush1.bf16.msra.mxu0 %v1000
    %1342 = vmatprep.subr.bf16.mxu0 %v997
    %1343 = vmatpush1.bf16.msra.mxu0 %v996
    %1344 = vmatprep.subr.bf16.mxu0 %v993
    %1345 = vmatpush1.bf16.msra.mxu0 %v992
    %1346 = vmatprep.subr.bf16.mxu0 %v1053
    %1347 = vmatpush2.bf16.msra.mxu0 %v1052
    %1348 = vmatprep.subr.bf16.mxu0 %v1049
    %1349 = vmatpush2.bf16.msra.mxu0 %v1048
    %1350 = vmatprep.subr.bf16.mxu0 %v1045
    %1351 = vmatpush2.bf16.msra.mxu0 %v1044
    %1352 = vmatprep.subr.bf16.mxu0 %v1041
    %1353 = vmatpush2.bf16.msra.mxu0 %v1040
    %1354 = vmatprep.subr.bf16.mxu0 %v1037
    %1355 = vmatpush2.bf16.msra.mxu0 %v1036
    %1356 = vmatprep.subr.bf16.mxu0 %v1033
    %1357 = vmatpush2.bf16.msra.mxu0 %v1032
    %1358 = vmatprep.subr.bf16.mxu0 %v1029
    %1359 = vmatpush2.bf16.msra.mxu0 %v1028
    %1360 = vmatprep.subr.bf16.mxu0 %v1025
    %1361 = vmatpush2.bf16.msra.mxu0 %v1024
    %1362 = vmatprep.mubr.bf16.mxu0 %v281
    %1363 = vmatmul.mubr.bf16.gmra.mxu0 %v280
    %v1364 = vpop.f32.mrf.mxu0
    %v1365 = vadd.f32 %v1324, %v1364
    %v1366 = vpop.f32.mrf.mxu0
    %v1367 = vadd.f32 %v1326, %v1366
    %v1368 = vpop.f32.mrf.mxu0
    %v1369 = vpop.f32.mrf.mxu0
    %1370 = vdwg.mxu0
    %1371 = vmatprep.subr.bf16.mxu0 %v895
    %1372 = vmatpush1.bf16.msra.mxu0 %v894
    %1373 = vmatprep.subr.bf16.mxu0 %v891
    %1374 = vmatpush1.bf16.msra.mxu0 %v890
    %1375 = vmatprep.subr.bf16.mxu0 %v887
    %1376 = vmatpush1.bf16.msra.mxu0 %v886
    %1377 = vmatprep.subr.bf16.mxu0 %v883
    %1378 = vmatpush1.bf16.msra.mxu0 %v882
    %1379 = vmatprep.subr.bf16.mxu0 %v879
    %1380 = vmatpush1.bf16.msra.mxu0 %v878
    %1381 = vmatprep.subr.bf16.mxu0 %v875
    %1382 = vmatpush1.bf16.msra.mxu0 %v874
    %1383 = vmatprep.subr.bf16.mxu0 %v871
    %1384 = vmatpush1.bf16.msra.mxu0 %v870
    %1385 = vmatprep.subr.bf16.mxu0 %v867
    %1386 = vmatpush1.bf16.msra.mxu0 %v866
    %1387 = vmatprep.subr.bf16.mxu0 %v927
    %1388 = vmatpush2.bf16.msra.mxu0 %v926
    %1389 = vmatprep.subr.bf16.mxu0 %v923
    %1390 = vmatpush2.bf16.msra.mxu0 %v922
    %1391 = vmatprep.subr.bf16.mxu0 %v919
    %1392 = vmatpush2.bf16.msra.mxu0 %v918
    %1393 = vmatprep.subr.bf16.mxu0 %v915
    %1394 = vmatpush2.bf16.msra.mxu0 %v914
    %1395 = vmatprep.subr.bf16.mxu0 %v911
    %1396 = vmatpush2.bf16.msra.mxu0 %v910
    %1397 = vmatprep.subr.bf16.mxu0 %v907
    %1398 = vmatpush2.bf16.msra.mxu0 %v906
    %1399 = vmatprep.subr.bf16.mxu0 %v903
    %1400 = vmatpush2.bf16.msra.mxu0 %v902
    %1401 = vmatprep.subr.bf16.mxu0 %v899
    %1402 = vmatpush2.bf16.msra.mxu0 %v898
    %1403 = vmatprep.mubr.bf16.mxu0 %v277
    %1404 = vmatmul.mubr.bf16.gmra.mxu0 %v276
    %v1405 = vpop.f32.mrf.mxu0
    %v1406 = vadd.f32 %v258, %v1405
    %v1407 = vpop.f32.mrf.mxu0
    %v1408 = vadd.f32 %v262, %v1407
    %v1409 = vpop.f32.mrf.mxu0
    %v1410 = vpop.f32.mrf.mxu0
    %1411 = vdwg.mxu0
    %1412 = vmatprep.subr.bf16.mxu0 %v959
    %1413 = vmatpush1.bf16.msra.mxu0 %v958
    %1414 = vmatprep.subr.bf16.mxu0 %v955
    %1415 = vmatpush1.bf16.msra.mxu0 %v954
    %1416 = vmatprep.subr.bf16.mxu0 %v951
    %1417 = vmatpush1.bf16.msra.mxu0 %v950
    %1418 = vmatprep.subr.bf16.mxu0 %v947
    %1419 = vmatpush1.bf16.msra.mxu0 %v946
    %1420 = vmatprep.subr.bf16.mxu0 %v943
    %1421 = vmatpush1.bf16.msra.mxu0 %v942
    %1422 = vmatprep.subr.bf16.mxu0 %v939
    %1423 = vmatpush1.bf16.msra.mxu0 %v938
    %1424 = vmatprep.subr.bf16.mxu0 %v935
    %1425 = vmatpush1.bf16.msra.mxu0 %v934
    %1426 = vmatprep.subr.bf16.mxu0 %v931
    %1427 = vmatpush1.bf16.msra.mxu0 %v930
    %1428 = vmatprep.subr.bf16.mxu0 %v991
    %1429 = vmatpush2.bf16.msra.mxu0 %v990
    %1430 = vmatprep.subr.bf16.mxu0 %v987
    %1431 = vmatpush2.bf16.msra.mxu0 %v986
    %1432 = vmatprep.subr.bf16.mxu0 %v983
    %1433 = vmatpush2.bf16.msra.mxu0 %v982
    %1434 = vmatprep.subr.bf16.mxu0 %v979
    %1435 = vmatpush2.bf16.msra.mxu0 %v978
    %1436 = vmatprep.subr.bf16.mxu0 %v975
    %1437 = vmatpush2.bf16.msra.mxu0 %v974
    %1438 = vmatprep.subr.bf16.mxu0 %v971
    %1439 = vmatpush2.bf16.msra.mxu0 %v970
    %1440 = vmatprep.subr.bf16.mxu0 %v967
    %1441 = vmatpush2.bf16.msra.mxu0 %v966
    %1442 = vmatprep.subr.bf16.mxu0 %v963
    %1443 = vmatpush2.bf16.msra.mxu0 %v962
    %1444 = vmatprep.mubr.bf16.mxu0 %v279
    %1445 = vmatmul.mubr.bf16.gmra.mxu0 %v278
    %v1446 = vpop.f32.mrf.mxu0
    %v1447 = vadd.f32 %v1406, %v1446
    %v1448 = vpop.f32.mrf.mxu0
    %v1449 = vadd.f32 %v1408, %v1448
    %v1450 = vpop.f32.mrf.mxu0
    %v1451 = vpop.f32.mrf.mxu0
    %1452 = vdwg.mxu0
    %1453 = vmatprep.subr.bf16.mxu0 %v1023
    %1454 = vmatpush1.bf16.msra.mxu0 %v1022
    %1455 = vmatprep.subr.bf16.mxu0 %v1019
    %1456 = vmatpush1.bf16.msra.mxu0 %v1018
    %1457 = vmatprep.subr.bf16.mxu0 %v1015
    %1458 = vmatpush1.bf16.msra.mxu0 %v1014
    %1459 = vmatprep.subr.bf16.mxu0 %v1011
    %1460 = vmatpush1.bf16.msra.mxu0 %v1010
    %1461 = vmatprep.subr.bf16.mxu0 %v1007
    %1462 = vmatpush1.bf16.msra.mxu0 %v1006
    %1463 = vmatprep.subr.bf16.mxu0 %v1003
    %1464 = vmatpush1.bf16.msra.mxu0 %v1002
    %1465 = vmatprep.subr.bf16.mxu0 %v999
    %1466 = vmatpush1.bf16.msra.mxu0 %v998
    %1467 = vmatprep.subr.bf16.mxu0 %v995
    %1468 = vmatpush1.bf16.msra.mxu0 %v994
    %1469 = vmatprep.subr.bf16.mxu0 %v1055
    %1470 = vmatpush2.bf16.msra.mxu0 %v1054
    %1471 = vmatprep.subr.bf16.mxu0 %v1051
    %1472 = vmatpush2.bf16.msra.mxu0 %v1050
    %1473 = vmatprep.subr.bf16.mxu0 %v1047
    %1474 = vmatpush2.bf16.msra.mxu0 %v1046
    %1475 = vmatprep.subr.bf16.mxu0 %v1043
    %1476 = vmatpush2.bf16.msra.mxu0 %v1042
    %1477 = vmatprep.subr.bf16.mxu0 %v1039
    %1478 = vmatpush2.bf16.msra.mxu0 %v1038
    %1479 = vmatprep.subr.bf16.mxu0 %v1035
    %1480 = vmatpush2.bf16.msra.mxu0 %v1034
    %1481 = vmatprep.subr.bf16.mxu0 %v1031
    %1482 = vmatpush2.bf16.msra.mxu0 %v1030
    %1483 = vmatprep.subr.bf16.mxu0 %v1027
    %1484 = vmatpush2.bf16.msra.mxu0 %v1026
    %1485 = vmatprep.mubr.bf16.mxu0 %v281
    %1486 = vmatmul.mubr.bf16.gmra.mxu0 %v280
    %v1487 = vpop.f32.mrf.mxu0
    %v1488 = vadd.f32 %v1447, %v1487
    %v1489 = vpop.f32.mrf.mxu0
    %v1490 = vadd.f32 %v1449, %v1489
    %v1491 = vpop.f32.mrf.mxu0
    %v1492 = vpop.f32.mrf.mxu0
    %1493 = vdwg.mxu0
    %v1494 = vpack.c.bf16 %v1365, %v1365
    %v1495 = vpack.c.bf16 %v1367, %v1367
    %v1496 = vpack.c.bf16 %v1488, %v1488
    %v1497 = vpack.c.bf16 %v1490, %v1490
    %v1498 = vld [vmem:[#allocation5] sm:$0xf]
    %v1499 = vld [vmem:[#allocation5 + $0x4] sm:$0xf]
    %v1500 = vld [vmem:[#allocation5 + $0x8] sm:$0xf]
    %v1501 = vld [vmem:[#allocation5 + $0xc] sm:$0xf]
    %v1502 = vld [vmem:[#allocation5 + $0x10] sm:$0xf]
    %v1503 = vld [vmem:[#allocation5 + $0x14] sm:$0xf]
    %v1504 = vld [vmem:[#allocation5 + $0x18] sm:$0xf]
    %v1505 = vld [vmem:[#allocation5 + $0x1c] sm:$0xf]
    %v1506 = vld [vmem:[#allocation5 + $0x20] sm:$0xf]
    %v1507 = vld [vmem:[#allocation5 + $0x24] sm:$0xf]
    %v1508 = vld [vmem:[#allocation5 + $0x28] sm:$0xf]
    %v1509 = vld [vmem:[#allocation5 + $0x2c] sm:$0xf]
    %v1510 = vld [vmem:[#allocation5 + $0x30] sm:$0xf]
    %v1511 = vld [vmem:[#allocation5 + $0x34] sm:$0xf]
    %v1512 = vld [vmem:[#allocation5 + $0x38] sm:$0xf]
    %v1513 = vld [vmem:[#allocation5 + $0x3c] sm:$0xf]
    %v1514 = vld [vmem:[#allocation5 + $0x40] sm:$0xf]
    %v1515 = vld [vmem:[#allocation5 + $0x44] sm:$0xf]
    %v1516 = vld [vmem:[#allocation5 + $0x48] sm:$0xf]
    %v1517 = vld [vmem:[#allocation5 + $0x4c] sm:$0xf]
    %v1518 = vld [vmem:[#allocation5 + $0x50] sm:$0xf]
    %v1519 = vld [vmem:[#allocation5 + $0x54] sm:$0xf]
    %v1520 = vld [vmem:[#allocation5 + $0x58] sm:$0xf]
    %v1521 = vld [vmem:[#allocation5 + $0x5c] sm:$0xf]
    %v1522 = vld [vmem:[#allocation5 + $0x60] sm:$0xf]
    %v1523 = vld [vmem:[#allocation5 + $0x64] sm:$0xf]
    %v1524 = vld [vmem:[#allocation5 + $0x68] sm:$0xf]
    %v1525 = vld [vmem:[#allocation5 + $0x6c] sm:$0xf]
    %v1526 = vld [vmem:[#allocation5 + $0x70] sm:$0xf]
    %v1527 = vld [vmem:[#allocation5 + $0x74] sm:$0xf]
    %v1528 = vld [vmem:[#allocation5 + $0x78] sm:$0xf]
    %v1529 = vld [vmem:[#allocation5 + $0x7c] sm:$0xf]
    %v1530 = vld [vmem:[#allocation5 + $0x80] sm:$0xf]
    %v1531 = vld [vmem:[#allocation5 + $0x84] sm:$0xf]
    %v1532 = vld [vmem:[#allocation5 + $0x88] sm:$0xf]
    %v1533 = vld [vmem:[#allocation5 + $0x8c] sm:$0xf]
    %v1534 = vld [vmem:[#allocation5 + $0x90] sm:$0xf]
    %v1535 = vld [vmem:[#allocation5 + $0x94] sm:$0xf]
    %v1536 = vld [vmem:[#allocation5 + $0x98] sm:$0xf]
    %v1537 = vld [vmem:[#allocation5 + $0x9c] sm:$0xf]
    %v1538 = vld [vmem:[#allocation5 + $0xa0] sm:$0xf]
    %v1539 = vld [vmem:[#allocation5 + $0xa4] sm:$0xf]
    %v1540 = vld [vmem:[#allocation5 + $0xa8] sm:$0xf]
    %v1541 = vld [vmem:[#allocation5 + $0xac] sm:$0xf]
    %v1542 = vld [vmem:[#allocation5 + $0xb0] sm:$0xf]
    %v1543 = vld [vmem:[#allocation5 + $0xb4] sm:$0xf]
    %v1544 = vld [vmem:[#allocation5 + $0xb8] sm:$0xf]
    %v1545 = vld [vmem:[#allocation5 + $0xbc] sm:$0xf]
    %v1546 = vld [vmem:[#allocation5 + $0xc0] sm:$0xf]
    %v1547 = vld [vmem:[#allocation5 + $0xc4] sm:$0xf]
    %v1548 = vld [vmem:[#allocation5 + $0xc8] sm:$0xf]
    %v1549 = vld [vmem:[#allocation5 + $0xcc] sm:$0xf]
    %v1550 = vld [vmem:[#allocation5 + $0xd0] sm:$0xf]
    %v1551 = vld [vmem:[#allocation5 + $0xd4] sm:$0xf]
    %v1552 = vld [vmem:[#allocation5 + $0xd8] sm:$0xf]
    %v1553 = vld [vmem:[#allocation5 + $0xdc] sm:$0xf]
    %v1554 = vld [vmem:[#allocation5 + $0xe0] sm:$0xf]
    %v1555 = vld [vmem:[#allocation5 + $0xe4] sm:$0xf]
    %v1556 = vld [vmem:[#allocation5 + $0xe8] sm:$0xf]
    %v1557 = vld [vmem:[#allocation5 + $0xec] sm:$0xf]
    %v1558 = vld [vmem:[#allocation5 + $0xf0] sm:$0xf]
    %v1559 = vld [vmem:[#allocation5 + $0xf4] sm:$0xf]
    %v1560 = vld [vmem:[#allocation5 + $0xf8] sm:$0xf]
    %v1561 = vld [vmem:[#allocation5 + $0xfc] sm:$0xf]
    %v1562 = vld [vmem:[%s4] sm:$0x1]
    %v1564 = vlaneseq
    %v1565 = vshrl.u32 %v1564, 7
    %v1566 = vsub.s32 0, %v1565
    %v1567 = vrot.slane %v1562, %v1566
    %v1633 = vunpack.c.l.b16 %v1498
    %v1634 = vunpack.c.l.b16 %v1499
    %v1635 = vunpack.c.l.b16 %v1500
    %v1636 = vunpack.c.l.b16 %v1501
    %v1637 = vunpack.c.l.b16 %v1502
    %v1638 = vunpack.c.l.b16 %v1503
    %v1639 = vunpack.c.l.b16 %v1504
    %v1640 = vunpack.c.l.b16 %v1505
    %v1641 = vunpack.c.l.b16 %v1506
    %v1642 = vunpack.c.l.b16 %v1507
    %v1643 = vunpack.c.l.b16 %v1508
    %v1644 = vunpack.c.l.b16 %v1509
    %v1645 = vunpack.c.l.b16 %v1510
    %v1646 = vunpack.c.l.b16 %v1511
    %v1647 = vunpack.c.l.b16 %v1512
    %v1648 = vunpack.c.l.b16 %v1513
    %v1649 = vunpack.c.l.b16 %v1514
    %v1650 = vunpack.c.l.b16 %v1515
    %v1651 = vunpack.c.l.b16 %v1516
    %v1652 = vunpack.c.l.b16 %v1517
    %v1653 = vunpack.c.l.b16 %v1518
    %v1654 = vunpack.c.l.b16 %v1519
    %v1655 = vunpack.c.l.b16 %v1520
    %v1656 = vunpack.c.l.b16 %v1521
    %v1657 = vunpack.c.l.b16 %v1522
    %v1658 = vunpack.c.l.b16 %v1523
    %v1659 = vunpack.c.l.b16 %v1524
    %v1660 = vunpack.c.l.b16 %v1525
    %v1661 = vunpack.c.l.b16 %v1526
    %v1662 = vunpack.c.l.b16 %v1527
    %v1663 = vunpack.c.l.b16 %v1528
    %v1664 = vunpack.c.l.b16 %v1529
    %v1665 = vunpack.c.l.b16 %v1530
    %v1666 = vunpack.c.l.b16 %v1531
    %v1667 = vunpack.c.l.b16 %v1532
    %v1668 = vunpack.c.l.b16 %v1533
    %v1669 = vunpack.c.l.b16 %v1534
    %v1670 = vunpack.c.l.b16 %v1535
    %v1671 = vunpack.c.l.b16 %v1536
    %v1672 = vunpack.c.l.b16 %v1537
    %v1673 = vunpack.c.l.b16 %v1538
    %v1674 = vunpack.c.l.b16 %v1539
    %v1675 = vunpack.c.l.b16 %v1540
    %v1676 = vunpack.c.l.b16 %v1541
    %v1677 = vunpack.c.l.b16 %v1542
    %v1678 = vunpack.c.l.b16 %v1543
    %v1679 = vunpack.c.l.b16 %v1544
    %v1680 = vunpack.c.l.b16 %v1545
    %v1681 = vunpack.c.l.b16 %v1546
    %v1682 = vunpack.c.l.b16 %v1547
    %v1683 = vunpack.c.l.b16 %v1548
    %v1684 = vunpack.c.l.b16 %v1549
    %v1685 = vunpack.c.l.b16 %v1550
    %v1686 = vunpack.c.l.b16 %v1551
    %v1687 = vunpack.c.l.b16 %v1552
    %v1688 = vunpack.c.l.b16 %v1553
    %v1689 = vunpack.c.l.b16 %v1554
    %v1690 = vunpack.c.l.b16 %v1555
    %v1691 = vunpack.c.l.b16 %v1556
    %v1692 = vunpack.c.l.b16 %v1557
    %v1693 = vunpack.c.l.b16 %v1558
    %v1694 = vunpack.c.l.b16 %v1559
    %v1695 = vunpack.c.l.b16 %v1560
    %v1696 = vunpack.c.l.b16 %v1561
    %v1697 = vpack.c.b16 %v1634, %v1633
    %v1698 = vpack.c.b16 %v1636, %v1635
    %v1699 = vpack.c.b16 %v1638, %v1637
    %v1700 = vpack.c.b16 %v1640, %v1639
    %v1701 = vpack.c.b16 %v1642, %v1641
    %v1702 = vpack.c.b16 %v1644, %v1643
    %v1703 = vpack.c.b16 %v1646, %v1645
    %v1704 = vpack.c.b16 %v1648, %v1647
    %v1705 = vpack.c.b16 %v1650, %v1649
    %v1706 = vpack.c.b16 %v1652, %v1651
    %v1707 = vpack.c.b16 %v1654, %v1653
    %v1708 = vpack.c.b16 %v1656, %v1655
    %v1709 = vpack.c.b16 %v1658, %v1657
    %v1710 = vpack.c.b16 %v1660, %v1659
    %v1711 = vpack.c.b16 %v1662, %v1661
    %v1712 = vpack.c.b16 %v1664, %v1663
    %v1713 = vpack.c.b16 %v1666, %v1665
    %v1714 = vpack.c.b16 %v1668, %v1667
    %v1715 = vpack.c.b16 %v1670, %v1669
    %v1716 = vpack.c.b16 %v1672, %v1671
    %v1717 = vpack.c.b16 %v1674, %v1673
    %v1718 = vpack.c.b16 %v1676, %v1675
    %v1719 = vpack.c.b16 %v1678, %v1677
    %v1720 = vpack.c.b16 %v1680, %v1679
    %v1721 = vpack.c.b16 %v1682, %v1681
    %v1722 = vpack.c.b16 %v1684, %v1683
    %v1723 = vpack.c.b16 %v1686, %v1685
    %v1724 = vpack.c.b16 %v1688, %v1687
    %v1725 = vpack.c.b16 %v1690, %v1689
    %v1726 = vpack.c.b16 %v1692, %v1691
    %v1727 = vpack.c.b16 %v1694, %v1693
    %v1728 = vpack.c.b16 %v1696, %v1695
    %1761 = vmatprep.subr.bf16.mxu0 0
    %1762 = vmatpush1.bf16.msra.mxu0 %v1704
    %1763 = vmatprep.subr.bf16.mxu0 0
    %1764 = vmatpush1.bf16.msra.mxu0 %v1703
    %1765 = vmatprep.subr.bf16.mxu0 0
    %1766 = vmatpush1.bf16.msra.mxu0 %v1702
    %1767 = vmatprep.subr.bf16.mxu0 0
    %1768 = vmatpush1.bf16.msra.mxu0 %v1701
    %1769 = vmatprep.subr.bf16.mxu0 0
    %1770 = vmatpush1.bf16.msra.mxu0 %v1700
    %1771 = vmatprep.subr.bf16.mxu0 0
    %1772 = vmatpush1.bf16.msra.mxu0 %v1699
    %1773 = vmatprep.subr.bf16.mxu0 0
    %1774 = vmatpush1.bf16.msra.mxu0 %v1698
    %1775 = vmatprep.subr.bf16.mxu0 0
    %1776 = vmatpush1.bf16.msra.mxu0 %v1697
    %1777 = vmatprep.subr.bf16.mxu0 0
    %1778 = vmatpush2.bf16.msra.mxu0 %v1712
    %1779 = vmatprep.subr.bf16.mxu0 0
    %1780 = vmatpush2.bf16.msra.mxu0 %v1711
    %1781 = vmatprep.subr.bf16.mxu0 0
    %1782 = vmatpush2.bf16.msra.mxu0 %v1710
    %1783 = vmatprep.subr.bf16.mxu0 0
    %1784 = vmatpush2.bf16.msra.mxu0 %v1709
    %1785 = vmatprep.subr.bf16.mxu0 0
    %1786 = vmatpush2.bf16.msra.mxu0 %v1708
    %1787 = vmatprep.subr.bf16.mxu0 0
    %1788 = vmatpush2.bf16.msra.mxu0 %v1707
    %1789 = vmatprep.subr.bf16.mxu0 0
    %1790 = vmatpush2.bf16.msra.mxu0 %v1706
    %1791 = vmatprep.subr.bf16.mxu0 0
    %1792 = vmatpush2.bf16.msra.mxu0 %v1705
    %1793 = vmatprep.mubr.bf16.mxu0 %v1495
    %1794 = vmatmul.mubr.bf16.gmra.mxu0 %v1494
    %v1795 = vpop.f32.mrf.mxu0
    %v1796 = vadd.f32 %v1567, %v1795
    %v1797 = vpop.f32.mrf.mxu0
    %v1798 = vpop.f32.mrf.mxu0
    %v1799 = vpop.f32.mrf.mxu0
    %1800 = vdwg.mxu0
    %1801 = vmatprep.subr.bf16.mxu0 0
    %1802 = vmatpush1.bf16.msra.mxu0 %v1720
    %1803 = vmatprep.subr.bf16.mxu0 0
    %1804 = vmatpush1.bf16.msra.mxu0 %v1719
    %1805 = vmatprep.subr.bf16.mxu0 0
    %1806 = vmatpush1.bf16.msra.mxu0 %v1718
    %1807 = vmatprep.subr.bf16.mxu0 0
    %1808 = vmatpush1.bf16.msra.mxu0 %v1717
    %1809 = vmatprep.subr.bf16.mxu0 0
    %1810 = vmatpush1.bf16.msra.mxu0 %v1716
    %1811 = vmatprep.subr.bf16.mxu0 0
    %1812 = vmatpush1.bf16.msra.mxu0 %v1715
    %1813 = vmatprep.subr.bf16.mxu0 0
    %1814 = vmatpush1.bf16.msra.mxu0 %v1714
    %1815 = vmatprep.subr.bf16.mxu0 0
    %1816 = vmatpush1.bf16.msra.mxu0 %v1713
    %1817 = vmatprep.subr.bf16.mxu0 0
    %1818 = vmatpush2.bf16.msra.mxu0 %v1728
    %1819 = vmatprep.subr.bf16.mxu0 0
    %1820 = vmatpush2.bf16.msra.mxu0 %v1727
    %1821 = vmatprep.subr.bf16.mxu0 0
    %1822 = vmatpush2.bf16.msra.mxu0 %v1726
    %1823 = vmatprep.subr.bf16.mxu0 0
    %1824 = vmatpush2.bf16.msra.mxu0 %v1725
    %1825 = vmatprep.subr.bf16.mxu0 0
    %1826 = vmatpush2.bf16.msra.mxu0 %v1724
    %1827 = vmatprep.subr.bf16.mxu0 0
    %1828 = vmatpush2.bf16.msra.mxu0 %v1723
    %1829 = vmatprep.subr.bf16.mxu0 0
    %1830 = vmatpush2.bf16.msra.mxu0 %v1722
    %1831 = vmatprep.subr.bf16.mxu0 0
    %1832 = vmatpush2.bf16.msra.mxu0 %v1721
    %1833 = vmatprep.mubr.bf16.mxu0 %v1497
    %1834 = vmatmul.mubr.bf16.gmra.mxu0 %v1496
    %v1835 = vpop.f32.mrf.mxu0
    %v1836 = vadd.f32 %v1796, %v1835
    %v1837 = vpop.f32.mrf.mxu0
    %v1838 = vpop.f32.mrf.mxu0
    %v1839 = vpop.f32.mrf.mxu0
    %1840 = vdwg.mxu0
    %1841 = vst [vmem:[#allocation7] sm:$0xff] %v1836
    // Predicated region
    $region30: #{_fused_joint_forward.1} parent=1 // pred_check
      _
    $region31: #{_fused_joint_forward.1} parent=1 // pred_check_branch
      %1843 = sbr.rel (0) target = $region33
    $region32: #{_fused_joint_forward.1} parent=1 // pred_region
      %s1845 = ssub.s32 128, 128
      %1846 = vsyncadd [#allocation4], %s1845
      %s1848 = sshll.u32 [#allocation7], 4
      %s1849 = int_to_ptr.vmem [resolvable:$true] %s1848
      %1851 = dma.vmem_to_hbm [thread:$0]  %s1849, 128, %s5, [#allocation4]
    $region33: #{_fused_joint_forward.1} parent=1 // pred_fallthru
      _
    // Predicated region
    $region34: #{_fused_joint_forward.1} parent=1 // pred_check
      _
    $region35: #{_fused_joint_forward.1} parent=1 // pred_check_branch
      %1853 = sbr.rel (0) target = $region37
    $region36: #{_fused_joint_forward.1} parent=1 // pred_region
      %1854 = dma.done [#allocation4], 128
    $region37: #{_fused_joint_forward.1} parent=1 // pred_fallthru
      _
    %1855 = vsyncpa [#allocation3], 1
    %1856 = vsyncpa [#allocation6], 1
    %1857 = vsyncpa [#allocation4], 1

</llo_original>
